<compile_context>
chip_gen: v7x
topology: tpu7x:2x2x1
jax: 0.10.0
libtpu: 0.0.40
codegen_flags: <defaults>
</compile_context>

<pallas_src>
import functools

import jax
import jax.numpy as jnp
from jax.experimental import pallas as pl
from jax.experimental.pallas import tpu as pltpu


def transformer_block_kernel(x_ref, wqkv_ref, wo_ref, bo_ref, g1_ref, b1_ref,
                             wffn_ref, g2_ref, b2_ref, o_ref, *,
                             heads, dim_head, eps):
    B, N, C = x_ref.shape
    H, D = heads, dim_head
    HD = H * D

    x2d = x_ref[...].reshape(B * N, C)                       # (B*N, C) channel-last

    # ---- fused QKV projection: one matmul for q, k, v of every head --------
    # (the attention scale is pre-folded into the q columns of wqkv)
    qkv = jnp.dot(x2d, wqkv_ref[...],
                  preferred_element_type=jnp.float32)        # (B*N, 3*HD)
    q_all = qkv[:, 0 * HD:1 * HD]
    k_all = qkv[:, 1 * HD:2 * HD]
    v_all = qkv[:, 2 * HD:3 * HD]

    # ---- attention, statically unrolled over (batch, head) -----------------
    # TODO(synk): for large N (real point clouds) switch to flash-style KV
    # tiling with online softmax instead of materializing the (N, N) scores,
    # and re-derive tile sizes against v7x's 64 MiB VMEM.
    batch_outs = []
    for b in range(B):
        rows = slice(b * N, (b + 1) * N)
        head_outs = []
        for h in range(H):
            cols = slice(h * D, (h + 1) * D)
            qb = q_all[rows, cols]                            # (N, D), pre-scaled
            kb = k_all[rows, cols]
            vb = v_all[rows, cols]
            dots = jnp.dot(qb, kb.T,
                           preferred_element_type=jnp.float32)     # (N, N)
            m = jnp.max(dots, axis=-1, keepdims=True)
            p = jnp.exp(dots - m)
            denom = jnp.sum(p, axis=-1, keepdims=True)
            attn = p * pl.reciprocal(denom, approx=True)            # softmax(-1)
            head_outs.append(
                jnp.dot(attn, vb, preferred_element_type=jnp.float32))  # (N, D)
        batch_outs.append(jnp.concatenate(head_outs, axis=-1))          # (N, HD)
    att_out = jnp.concatenate(batch_outs, axis=0)                       # (B*N, HD)

    # ---- to_out[0]: Conv1d(inner_dim, dim, 1) == matmul + bias -------------
    y = jnp.dot(att_out, wo_ref[...],
                preferred_element_type=jnp.float32) + bo_ref[...]   # (B*N, C)

    # ---- to_out[1]: BatchNorm1d(dim), training-mode batch statistics -------
    inv_n = 1.0 / float(B * N)
    mean1 = jnp.sum(y, axis=0, keepdims=True) * inv_n
    yc = y - mean1
    var1 = jnp.sum(yc * yc, axis=0, keepdims=True) * inv_n
    y_bn = yc * jax.lax.rsqrt(var1 + eps) * g1_ref[...] + b1_ref[...]

    # ---- att = relu(attention(x) + x) ---------------------------------------
    att = jnp.maximum(y_bn + x2d, 0.0)                               # (B*N, C)

    # ---- ffn: Conv1d(dim, dim, 1, bias=False) + BatchNorm1d(dim) ------------
    z = jnp.dot(att, wffn_ref[...], preferred_element_type=jnp.float32)
    mean2 = jnp.sum(z, axis=0, keepdims=True) * inv_n
    zc = z - mean2
    var2 = jnp.sum(zc * zc, axis=0, keepdims=True) * inv_n
    z_bn = zc * jax.lax.rsqrt(var2 + eps) * g2_ref[...] + b2_ref[...]

    # ---- out = relu(att + ffn(att)) -----------------------------------------
    out = jnp.maximum(att + z_bn, 0.0)
    o_ref[...] = out.reshape(B, N, C).astype(o_ref.dtype)


def transformer_block_forward(x, wqkv, wo, bo, g1, b1, wffn, g2, b2, *,
                              heads, dim_head, eps=1e-5):
    B, C, N = x.shape
    H, D = heads, dim_head
    HD = H * D
    assert wqkv.shape == (C, 3 * HD)

    # Fold the attention scale into the q columns of the fused QKV weight at
    # trace time (removes an (N, N) elementwise multiply per head tile).
    scale = float(D) ** (-0.5)
    wqkv = wqkv.at[:, :HD].multiply(scale)

    # Channel-last inside the kernel; single transpose in, single transpose out.
    xt = jnp.transpose(x, (0, 2, 1))                                 # (B, N, C)

    kernel = functools.partial(transformer_block_kernel,
                               heads=H, dim_head=D, eps=eps)

    # Single grid-less pallas_call: whole arrays live in VMEM (tiny shapes), so
    # the BatchNorm cross-(B,N) reductions come for free inside the same body.
    # TODO(synk): at large B*N, add a parallel row/batch grid axis (v7x
    # megacore) and carry the BN statistics in scratch accumulators instead.
    out = pl.pallas_call(
        kernel,
        out_shape=jax.ShapeDtypeStruct((B, N, C), jnp.float32),
        compiler_params=pltpu.CompilerParams(
            vmem_limit_bytes=64 * 1024 * 1024),
    )(xt, wqkv, wo, bo.reshape(1, C), g1.reshape(1, C), b1.reshape(1, C),
      wffn, g2.reshape(1, C), b2.reshape(1, C))

    return jnp.transpose(out, (0, 2, 1))                             # (B, dim, N)


if __name__ == "__main__":
    # Small shapes consistent with the module's forward: x is (batch, dim, points).
    B, DIM, N = 2, 32, 16
    HEADS, DIM_HEAD = 2, 32
    INNER = HEADS * DIM_HEAD

    key = jax.random.PRNGKey(0)
    keys = jax.random.split(key, 9)

    x = jax.random.normal(keys[0], (B, DIM, N), dtype=jnp.float32)
    wqkv = jax.random.normal(keys[1], (DIM, 3 * INNER), jnp.float32) * 0.1
    wo = jax.random.normal(keys[2], (INNER, DIM), jnp.float32) * 0.1
    bo = jax.random.normal(keys[3], (DIM,), jnp.float32) * 0.1
    g1 = jax.random.normal(keys[4], (DIM,), jnp.float32) * 0.1 + 1.0
    b1 = jax.random.normal(keys[5], (DIM,), jnp.float32) * 0.1
    wffn = jax.random.normal(keys[6], (DIM, DIM), jnp.float32) * 0.1
    g2 = jax.random.normal(keys[7], (DIM,), jnp.float32) * 0.1 + 1.0
    b2 = jax.random.normal(keys[8], (DIM,), jnp.float32) * 0.1

    fwd = jax.jit(functools.partial(transformer_block_forward,
                                    heads=HEADS, dim_head=DIM_HEAD))
    out = fwd(x, wqkv, wo, bo, g1, b1, wffn, g2, b2)
    jax.block_until_ready(out)
    assert out.shape == (B, DIM, N)
    assert bool(jnp.all(jnp.isfinite(out)))
    print("KERNEL_OK")
</pallas_src>

<mosaic_0001>
module attributes {stable_mosaic.version = 11 : i64} {
  func.func @transformer_block_kernel(%arg0: memref<2x16x32xf32, #tpu.memory_space<vmem>>, %arg1: memref<32x192xf32, #tpu.memory_space<vmem>>, %arg2: memref<64x32xf32, #tpu.memory_space<vmem>>, %arg3: memref<1x32xf32, #tpu.memory_space<vmem>>, %arg4: memref<1x32xf32, #tpu.memory_space<vmem>>, %arg5: memref<1x32xf32, #tpu.memory_space<vmem>>, %arg6: memref<32x32xf32, #tpu.memory_space<vmem>>, %arg7: memref<1x32xf32, #tpu.memory_space<vmem>>, %arg8: memref<1x32xf32, #tpu.memory_space<vmem>>, %arg9: memref<2x16x32xf32, #tpu.memory_space<vmem>>) attributes {dimension_semantics = [], scalar_prefetch = 0 : i64, scratch_operands = 0 : i64, tpu.core_type = #tpu.core_type<tc>} {
    %c0 = arith.constant 0 : index
    %c0_0 = arith.constant 0 : index
    %c0_1 = arith.constant 0 : index
    %0 = vector.load %arg0[%c0, %c0_0, %c0_1] : memref<2x16x32xf32, #tpu.memory_space<vmem>>, vector<2x16x32xf32>
    %1 = vector.shape_cast %0 : vector<2x16x32xf32> to vector<32x32xf32>
    %c0_2 = arith.constant 0 : index
    %c0_3 = arith.constant 0 : index
    %2 = vector.load %arg1[%c0_2, %c0_3] : memref<32x192xf32, #tpu.memory_space<vmem>>, vector<32x192xf32>
    %cst = arith.constant dense<0.000000e+00> : vector<32x192xf32>
    %3 = tpu.matmul %1, %2, %cst {dimension_numbers = #tpu.dot_dimension_numbers<[1], [0], [0], [1], [0, 0, 1, 1], [], []>} : vector<32x32xf32>, vector<32x192xf32>, vector<32x192xf32> -> vector<32x192xf32>
    %4 = vector.extract_strided_slice %3 {offsets = [0, 0], sizes = [32, 64], strides = [1, 1]} : vector<32x192xf32> to vector<32x64xf32>
    %5 = vector.extract_strided_slice %3 {offsets = [0, 64], sizes = [32, 64], strides = [1, 1]} : vector<32x192xf32> to vector<32x64xf32>
    %6 = vector.extract_strided_slice %3 {offsets = [0, 128], sizes = [32, 64], strides = [1, 1]} : vector<32x192xf32> to vector<32x64xf32>
    %7 = vector.extract_strided_slice %4 {offsets = [0, 0], sizes = [16, 32], strides = [1, 1]} : vector<32x64xf32> to vector<16x32xf32>
    %8 = vector.extract_strided_slice %5 {offsets = [0, 0], sizes = [16, 32], strides = [1, 1]} : vector<32x64xf32> to vector<16x32xf32>
    %9 = vector.extract_strided_slice %6 {offsets = [0, 0], sizes = [16, 32], strides = [1, 1]} : vector<32x64xf32> to vector<16x32xf32>
    %10 = tpu.transpose %8, [1, 0] : vector<16x32xf32> -> vector<32x16xf32>
    %cst_4 = arith.constant dense<0.000000e+00> : vector<16x16xf32>
    %11 = tpu.matmul %7, %10, %cst_4 {dimension_numbers = #tpu.dot_dimension_numbers<[1], [0], [0], [1], [0, 0, 1, 1], [], []>} : vector<16x32xf32>, vector<32x16xf32>, vector<16x16xf32> -> vector<16x16xf32>
    %cst_5 = arith.constant dense<0xFF800000> : vector<16xf32>
    %12 = vector.multi_reduction <maximumf>, %11, %cst_5 [1] : vector<16x16xf32> to vector<16xf32>
    %13 = vector.shape_cast %12 : vector<16xf32> to vector<16x1xf32>
    %14 = vector.broadcast %13 : vector<16x1xf32> to vector<16x16xf32>
    %15 = arith.subf %11, %14 : vector<16x16xf32>
    %16 = math.exp %15 : vector<16x16xf32>
    %cst_6 = arith.constant dense<0.000000e+00> : vector<16xf32>
    %17 = vector.multi_reduction <add>, %16, %cst_6 [1] : vector<16x16xf32> to vector<16xf32>
    %18 = vector.shape_cast %17 : vector<16xf32> to vector<16x1xf32>
    %19 = tpu.reciprocal %18 {approx = true} : vector<16x1xf32> -> vector<16x1xf32>
    %20 = vector.broadcast %19 : vector<16x1xf32> to vector<16x16xf32>
    %21 = arith.mulf %16, %20 : vector<16x16xf32>
    %cst_7 = arith.constant dense<0.000000e+00> : vector<16x32xf32>
    %22 = tpu.matmul %21, %9, %cst_7 {dimension_numbers = #tpu.dot_dimension_numbers<[1], [0], [0], [1], [0, 0, 1, 1], [], []>} : vector<16x16xf32>, vector<16x32xf32>, vector<16x32xf32> -> vector<16x32xf32>
    %23 = vector.extract_strided_slice %4 {offsets = [0, 32], sizes = [16, 32], strides = [1, 1]} : vector<32x64xf32> to vector<16x32xf32>
    %24 = vector.extract_strided_slice %5 {offsets = [0, 32], sizes = [16, 32], strides = [1, 1]} : vector<32x64xf32> to vector<16x32xf32>
    %25 = vector.extract_strided_slice %6 {offsets = [0, 32], sizes = [16, 32], strides = [1, 1]} : vector<32x64xf32> to vector<16x32xf32>
    %26 = tpu.transpose %24, [1, 0] : vector<16x32xf32> -> vector<32x16xf32>
    %cst_8 = arith.constant dense<0.000000e+00> : vector<16x16xf32>
    %27 = tpu.matmul %23, %26, %cst_8 {dimension_numbers = #tpu.dot_dimension_numbers<[1], [0], [0], [1], [0, 0, 1, 1], [], []>} : vector<16x32xf32>, vector<32x16xf32>, vector<16x16xf32> -> vector<16x16xf32>
    %cst_9 = arith.constant dense<0xFF800000> : vector<16xf32>
    %28 = vector.multi_reduction <maximumf>, %27, %cst_9 [1] : vector<16x16xf32> to vector<16xf32>
    %29 = vector.shape_cast %28 : vector<16xf32> to vector<16x1xf32>
    %30 = vector.broadcast %29 : vector<16x1xf32> to vector<16x16xf32>
    %31 = arith.subf %27, %30 : vector<16x16xf32>
    %32 = math.exp %31 : vector<16x16xf32>
    %cst_10 = arith.constant dense<0.000000e+00> : vector<16xf32>
    %33 = vector.multi_reduction <add>, %32, %cst_10 [1] : vector<16x16xf32> to vector<16xf32>
    %34 = vector.shape_cast %33 : vector<16xf32> to vector<16x1xf32>
    %35 = tpu.reciprocal %34 {approx = true} : vector<16x1xf32> -> vector<16x1xf32>
    %36 = vector.broadcast %35 : vector<16x1xf32> to vector<16x16xf32>
    %37 = arith.mulf %32, %36 : vector<16x16xf32>
    %cst_11 = arith.constant dense<0.000000e+00> : vector<16x32xf32>
    %38 = tpu.matmul %37, %25, %cst_11 {dimension_numbers = #tpu.dot_dimension_numbers<[1], [0], [0], [1], [0, 0, 1, 1], [], []>} : vector<16x16xf32>, vector<16x32xf32>, vector<16x32xf32> -> vector<16x32xf32>
    %39 = tpu.concatenate %22, %38 in 1 : vector<16x32xf32>, vector<16x32xf32> -> vector<16x64xf32>
    %40 = vector.extract_strided_slice %4 {offsets = [16, 0], sizes = [16, 32], strides = [1, 1]} : vector<32x64xf32> to vector<16x32xf32>
    %41 = vector.extract_strided_slice %5 {offsets = [16, 0], sizes = [16, 32], strides = [1, 1]} : vector<32x64xf32> to vector<16x32xf32>
    %42 = vector.extract_strided_slice %6 {offsets = [16, 0], sizes = [16, 32], strides = [1, 1]} : vector<32x64xf32> to vector<16x32xf32>
    %43 = tpu.transpose %41, [1, 0] : vector<16x32xf32> -> vector<32x16xf32>
    %cst_12 = arith.constant dense<0.000000e+00> : vector<16x16xf32>
    %44 = tpu.matmul %40, %43, %cst_12 {dimension_numbers = #tpu.dot_dimension_numbers<[1], [0], [0], [1], [0, 0, 1, 1], [], []>} : vector<16x32xf32>, vector<32x16xf32>, vector<16x16xf32> -> vector<16x16xf32>
    %cst_13 = arith.constant dense<0xFF800000> : vector<16xf32>
    %45 = vector.multi_reduction <maximumf>, %44, %cst_13 [1] : vector<16x16xf32> to vector<16xf32>
    %46 = vector.shape_cast %45 : vector<16xf32> to vector<16x1xf32>
    %47 = vector.broadcast %46 : vector<16x1xf32> to vector<16x16xf32>
    %48 = arith.subf %44, %47 : vector<16x16xf32>
    %49 = math.exp %48 : vector<16x16xf32>
    %cst_14 = arith.constant dense<0.000000e+00> : vector<16xf32>
    %50 = vector.multi_reduction <add>, %49, %cst_14 [1] : vector<16x16xf32> to vector<16xf32>
    %51 = vector.shape_cast %50 : vector<16xf32> to vector<16x1xf32>
    %52 = tpu.reciprocal %51 {approx = true} : vector<16x1xf32> -> vector<16x1xf32>
    %53 = vector.broadcast %52 : vector<16x1xf32> to vector<16x16xf32>
    %54 = arith.mulf %49, %53 : vector<16x16xf32>
    %cst_15 = arith.constant dense<0.000000e+00> : vector<16x32xf32>
    %55 = tpu.matmul %54, %42, %cst_15 {dimension_numbers = #tpu.dot_dimension_numbers<[1], [0], [0], [1], [0, 0, 1, 1], [], []>} : vector<16x16xf32>, vector<16x32xf32>, vector<16x32xf32> -> vector<16x32xf32>
    %56 = vector.extract_strided_slice %4 {offsets = [16, 32], sizes = [16, 32], strides = [1, 1]} : vector<32x64xf32> to vector<16x32xf32>
    %57 = vector.extract_strided_slice %5 {offsets = [16, 32], sizes = [16, 32], strides = [1, 1]} : vector<32x64xf32> to vector<16x32xf32>
    %58 = vector.extract_strided_slice %6 {offsets = [16, 32], sizes = [16, 32], strides = [1, 1]} : vector<32x64xf32> to vector<16x32xf32>
    %59 = tpu.transpose %57, [1, 0] : vector<16x32xf32> -> vector<32x16xf32>
    %cst_16 = arith.constant dense<0.000000e+00> : vector<16x16xf32>
    %60 = tpu.matmul %56, %59, %cst_16 {dimension_numbers = #tpu.dot_dimension_numbers<[1], [0], [0], [1], [0, 0, 1, 1], [], []>} : vector<16x32xf32>, vector<32x16xf32>, vector<16x16xf32> -> vector<16x16xf32>
    %cst_17 = arith.constant dense<0xFF800000> : vector<16xf32>
    %61 = vector.multi_reduction <maximumf>, %60, %cst_17 [1] : vector<16x16xf32> to vector<16xf32>
    %62 = vector.shape_cast %61 : vector<16xf32> to vector<16x1xf32>
    %63 = vector.broadcast %62 : vector<16x1xf32> to vector<16x16xf32>
    %64 = arith.subf %60, %63 : vector<16x16xf32>
    %65 = math.exp %64 : vector<16x16xf32>
    %cst_18 = arith.constant dense<0.000000e+00> : vector<16xf32>
    %66 = vector.multi_reduction <add>, %65, %cst_18 [1] : vector<16x16xf32> to vector<16xf32>
    %67 = vector.shape_cast %66 : vector<16xf32> to vector<16x1xf32>
    %68 = tpu.reciprocal %67 {approx = true} : vector<16x1xf32> -> vector<16x1xf32>
    %69 = vector.broadcast %68 : vector<16x1xf32> to vector<16x16xf32>
    %70 = arith.mulf %65, %69 : vector<16x16xf32>
    %cst_19 = arith.constant dense<0.000000e+00> : vector<16x32xf32>
    %71 = tpu.matmul %70, %58, %cst_19 {dimension_numbers = #tpu.dot_dimension_numbers<[1], [0], [0], [1], [0, 0, 1, 1], [], []>} : vector<16x16xf32>, vector<16x32xf32>, vector<16x32xf32> -> vector<16x32xf32>
    %72 = tpu.concatenate %55, %71 in 1 : vector<16x32xf32>, vector<16x32xf32> -> vector<16x64xf32>
    %73 = tpu.concatenate %39, %72 in 0 : vector<16x64xf32>, vector<16x64xf32> -> vector<32x64xf32>
    %c0_20 = arith.constant 0 : index
    %c0_21 = arith.constant 0 : index
    %74 = vector.load %arg2[%c0_20, %c0_21] : memref<64x32xf32, #tpu.memory_space<vmem>>, vector<64x32xf32>
    %cst_22 = arith.constant dense<0.000000e+00> : vector<32x32xf32>
    %75 = tpu.matmul %73, %74, %cst_22 {dimension_numbers = #tpu.dot_dimension_numbers<[1], [0], [0], [1], [0, 0, 1, 1], [], []>} : vector<32x64xf32>, vector<64x32xf32>, vector<32x32xf32> -> vector<32x32xf32>
    %c0_23 = arith.constant 0 : index
    %c0_24 = arith.constant 0 : index
    %76 = vector.load %arg3[%c0_23, %c0_24] : memref<1x32xf32, #tpu.memory_space<vmem>>, vector<1x32xf32>
    %77 = vector.broadcast %76 : vector<1x32xf32> to vector<32x32xf32>
    %78 = arith.addf %75, %77 : vector<32x32xf32>
    %cst_25 = arith.constant dense<0.000000e+00> : vector<32xf32>
    %79 = vector.multi_reduction <add>, %78, %cst_25 [0] : vector<32x32xf32> to vector<32xf32>
    %80 = vector.shape_cast %79 : vector<32xf32> to vector<1x32xf32>
    %cst_26 = arith.constant 3.125000e-02 : f32
    %81 = vector.broadcast %cst_26 : f32 to vector<1x32xf32>
    %82 = arith.mulf %80, %81 : vector<1x32xf32>
    %83 = vector.broadcast %82 : vector<1x32xf32> to vector<32x32xf32>
    %84 = arith.subf %78, %83 : vector<32x32xf32>
    %85 = arith.mulf %84, %84 : vector<32x32xf32>
    %cst_27 = arith.constant dense<0.000000e+00> : vector<32xf32>
    %86 = vector.multi_reduction <add>, %85, %cst_27 [0] : vector<32x32xf32> to vector<32xf32>
    %87 = vector.shape_cast %86 : vector<32xf32> to vector<1x32xf32>
    %cst_28 = arith.constant 3.125000e-02 : f32
    %88 = vector.broadcast %cst_28 : f32 to vector<1x32xf32>
    %89 = arith.mulf %87, %88 : vector<1x32xf32>
    %cst_29 = arith.constant 9.99999974E-6 : f32
    %90 = vector.broadcast %cst_29 : f32 to vector<1x32xf32>
    %91 = arith.addf %89, %90 : vector<1x32xf32>
    %92 = math.rsqrt %91 : vector<1x32xf32>
    %93 = vector.broadcast %92 : vector<1x32xf32> to vector<32x32xf32>
    %94 = arith.mulf %84, %93 : vector<32x32xf32>
    %c0_30 = arith.constant 0 : index
    %c0_31 = arith.constant 0 : index
    %95 = vector.load %arg4[%c0_30, %c0_31] : memref<1x32xf32, #tpu.memory_space<vmem>>, vector<1x32xf32>
    %96 = vector.broadcast %95 : vector<1x32xf32> to vector<32x32xf32>
    %97 = arith.mulf %94, %96 : vector<32x32xf32>
    %c0_32 = arith.constant 0 : index
    %c0_33 = arith.constant 0 : index
    %98 = vector.load %arg5[%c0_32, %c0_33] : memref<1x32xf32, #tpu.memory_space<vmem>>, vector<1x32xf32>
    %99 = vector.broadcast %98 : vector<1x32xf32> to vector<32x32xf32>
    %100 = arith.addf %97, %99 : vector<32x32xf32>
    %101 = arith.addf %100, %1 : vector<32x32xf32>
    %cst_34 = arith.constant 0.000000e+00 : f32
    %102 = vector.broadcast %cst_34 : f32 to vector<32x32xf32>
    %103 = arith.maximumf %101, %102 : vector<32x32xf32>
    %c0_35 = arith.constant 0 : index
    %c0_36 = arith.constant 0 : index
    %104 = vector.load %arg6[%c0_35, %c0_36] : memref<32x32xf32, #tpu.memory_space<vmem>>, vector<32x32xf32>
    %cst_37 = arith.constant dense<0.000000e+00> : vector<32x32xf32>
    %105 = tpu.matmul %103, %104, %cst_37 {dimension_numbers = #tpu.dot_dimension_numbers<[1], [0], [0], [1], [0, 0, 1, 1], [], []>} : vector<32x32xf32>, vector<32x32xf32>, vector<32x32xf32> -> vector<32x32xf32>
    %cst_38 = arith.constant dense<0.000000e+00> : vector<32xf32>
    %106 = vector.multi_reduction <add>, %105, %cst_38 [0] : vector<32x32xf32> to vector<32xf32>
    %107 = vector.shape_cast %106 : vector<32xf32> to vector<1x32xf32>
    %cst_39 = arith.constant 3.125000e-02 : f32
    %108 = vector.broadcast %cst_39 : f32 to vector<1x32xf32>
    %109 = arith.mulf %107, %108 : vector<1x32xf32>
    %110 = vector.broadcast %109 : vector<1x32xf32> to vector<32x32xf32>
    %111 = arith.subf %105, %110 : vector<32x32xf32>
    %112 = arith.mulf %111, %111 : vector<32x32xf32>
    %cst_40 = arith.constant dense<0.000000e+00> : vector<32xf32>
    %113 = vector.multi_reduction <add>, %112, %cst_40 [0] : vector<32x32xf32> to vector<32xf32>
    %114 = vector.shape_cast %113 : vector<32xf32> to vector<1x32xf32>
    %cst_41 = arith.constant 3.125000e-02 : f32
    %115 = vector.broadcast %cst_41 : f32 to vector<1x32xf32>
    %116 = arith.mulf %114, %115 : vector<1x32xf32>
    %cst_42 = arith.constant 9.99999974E-6 : f32
    %117 = vector.broadcast %cst_42 : f32 to vector<1x32xf32>
    %118 = arith.addf %116, %117 : vector<1x32xf32>
    %119 = math.rsqrt %118 : vector<1x32xf32>
    %120 = vector.broadcast %119 : vector<1x32xf32> to vector<32x32xf32>
    %121 = arith.mulf %111, %120 : vector<32x32xf32>
    %c0_43 = arith.constant 0 : index
    %c0_44 = arith.constant 0 : index
    %122 = vector.load %arg7[%c0_43, %c0_44] : memref<1x32xf32, #tpu.memory_space<vmem>>, vector<1x32xf32>
    %123 = vector.broadcast %122 : vector<1x32xf32> to vector<32x32xf32>
    %124 = arith.mulf %121, %123 : vector<32x32xf32>
    %c0_45 = arith.constant 0 : index
    %c0_46 = arith.constant 0 : index
    %125 = vector.load %arg8[%c0_45, %c0_46] : memref<1x32xf32, #tpu.memory_space<vmem>>, vector<1x32xf32>
    %126 = vector.broadcast %125 : vector<1x32xf32> to vector<32x32xf32>
    %127 = arith.addf %124, %126 : vector<32x32xf32>
    %128 = arith.addf %103, %127 : vector<32x32xf32>
    %cst_47 = arith.constant 0.000000e+00 : f32
    %129 = vector.broadcast %cst_47 : f32 to vector<32x32xf32>
    %130 = arith.maximumf %128, %129 : vector<32x32xf32>
    %131 = vector.shape_cast %130 : vector<32x32xf32> to vector<2x16x32xf32>
    %c0_48 = arith.constant 0 : index
    %c0_49 = arith.constant 0 : index
    %c0_50 = arith.constant 0 : index
    %132 = vector.load %arg9[%c0_48, %c0_49, %c0_50] : memref<2x16x32xf32, #tpu.memory_space<vmem>>, vector<2x16x32xf32>
    tpu.vector_store %arg9[%c0_48, %c0_49, %c0_50], %131 {strides = array<i32>} : memref<2x16x32xf32, #tpu.memory_space<vmem>>, vector<2x16x32xf32>,
    return
  }
}

</mosaic_0001>

<llo_original>
// kernel: transformer_block_forward.1
$region0: #{transformer_block_forward.1}
  #allocation0 [shape = 'u32[]', space=smem, size = 0x4, offset = 0x4, fixed_abs, tag = 'smem constant byte address 0x4 - core index']
  #allocation1 [shape = 'u32[144,128]{1,0:T(1,128)}', space=vmem, size = 0x12000, scoped, tag = 'internal scratch']
  %s0 = inlined_call_operand.hbm [shape: f32[2,16,32], index: 0, kind: input, shape index: {}]
  %s1 = inlined_call_operand.hbm [shape: f32[32,192], index: 1, kind: input, shape index: {}]
  %s2 = inlined_call_operand.hbm [shape: f32[64,32], index: 2, kind: input, shape index: {}]
  %s3 = inlined_call_operand.hbm [shape: f32[1,32], index: 3, kind: input, shape index: {}]
  %s4 = inlined_call_operand.hbm [shape: f32[1,32], index: 4, kind: input, shape index: {}]
  %s5 = inlined_call_operand.hbm [shape: f32[1,32], index: 5, kind: input, shape index: {}]
  %s6 = inlined_call_operand.hbm [shape: f32[32,32], index: 6, kind: input, shape index: {}]
  %s7 = inlined_call_operand.hbm [shape: f32[1,32], index: 7, kind: input, shape index: {}]
  %s8 = inlined_call_operand.hbm [shape: f32[1,32], index: 8, kind: input, shape index: {}]
  %s9 = inlined_call_operand.hbm [shape: f32[2,16,32], index: 9, kind: output, shape index: {}]
  %s10 = sld [smem:[#allocation0]]
  $region82: #{transformer_block_forward.1} parent=0
    _
  %s12 = ssub.s32 1, %s10
  %s13 = scalar_select 0, %s12, %s10
  $region1: #{transformer_block_forward.1} parent=0
    #allocation2 [shape = 'u8[16384]{0}', space=vmem, size = 0x4000, scoped, tag = 'input window, operand 0, single buffered']
    #allocation3 [shape = 's32[1]{0}', space=sflag, size = 0x4, scoped, tag = 'scoped memory for transformer_block_forward.1']
    #allocation4 [shape = 's32[1]{0}', space=sflag, size = 0x4, scoped, tag = 'scoped memory for transformer_block_forward.1']
    #allocation5 [shape = 'u8[32768]{0}', space=vmem, size = 0x8000, scoped, tag = 'input window, operand 1, single buffered']
    #allocation6 [shape = 's32[1]{0}', space=sflag, size = 0x4, scoped, tag = 'scoped memory for transformer_block_forward.1']
    #allocation7 [shape = 'u8[32768]{0}', space=vmem, size = 0x8000, scoped, tag = 'input window, operand 2, single buffered']
    #allocation8 [shape = 'u8[512]{0}', space=vmem, size = 0x400, scoped, tag = 'input window, operand 3, single buffered']
    #allocation9 [shape = 's32[1]{0}', space=sflag, size = 0x4, scoped, tag = 'scoped memory for transformer_block_forward.1']
    #allocation10 [shape = 'u8[512]{0}', space=vmem, size = 0x400, scoped, tag = 'input window, operand 4, single buffered']
    #allocation11 [shape = 'u8[512]{0}', space=vmem, size = 0x400, scoped, tag = 'input window, operand 5, single buffered']
    #allocation12 [shape = 's32[1]{0}', space=sflag, size = 0x4, scoped, tag = 'scoped memory for transformer_block_forward.1']
    #allocation13 [shape = 'u8[16384]{0}', space=vmem, size = 0x4000, scoped, tag = 'input window, operand 6, single buffered']
    #allocation14 [shape = 'u8[512]{0}', space=vmem, size = 0x400, scoped, tag = 'input window, operand 7, single buffered']
    #allocation15 [shape = 's32[1]{0}', space=sflag, size = 0x4, scoped, tag = 'scoped memory for transformer_block_forward.1']
    #allocation16 [shape = 'u8[512]{0}', space=vmem, size = 0x400, scoped, tag = 'input window, operand 8, single buffered']
    #allocation17 [shape = 'u8[16384]{0}', space=vmem, size = 0x4000, scoped, tag = 'output window, operand 0, single buffered']
    %14 = vsyncpa [#allocation3], 0
    %15 = vsyncpa [#allocation6], 0
    %16 = vsyncpa [#allocation9], 0
    %17 = vsyncpa [#allocation12], 0
    %18 = vsyncpa [#allocation15], 0
    %19 = vsyncpa [#allocation4], 0
    // Predicated region
    $region2: #{transformer_block_forward.1} parent=1 // pred_check
      _
    $region3: #{transformer_block_forward.1} parent=1 // pred_check_branch
      %21 = sbr.rel (0) target = $region5
    $region4: #{transformer_block_forward.1} parent=1 // pred_region
      %s23 = ssub.s32 512, 512
      %24 = vsyncadd [#allocation3], %s23
      %s25 = sshll.u32 [#allocation2], 4
      %s26 = int_to_ptr.vmem [resolvable:$true] %s25
      %31 = dma.hbm_to_vmem [thread:$0]  %s0, 512, %s26, [#allocation3], 128, 128, 8
    $region5: #{transformer_block_forward.1} parent=1 // pred_fallthru
      _
    // Predicated region
    $region6: #{transformer_block_forward.1} parent=1 // pred_check
      _
    $region7: #{transformer_block_forward.1} parent=1 // pred_check_branch
      %33 = sbr.rel (0) target = $region9
    $region8: #{transformer_block_forward.1} parent=1 // pred_region
      %s35 = ssub.s32 1024, 1024
      %36 = vsyncadd [#allocation6], %s35
      %s37 = sshll.u32 [#allocation5], 4
      %s38 = int_to_ptr.vmem [resolvable:$true] %s37
      %43 = dma.hbm_to_vmem [thread:$0]  %s1, 1024, %s38, [#allocation6], 256, 256, 16
    $region9: #{transformer_block_forward.1} parent=1 // pred_fallthru
      _
    // Predicated region
    $region10: #{transformer_block_forward.1} parent=1 // pred_check
      _
    $region11: #{transformer_block_forward.1} parent=1 // pred_check_branch
      %45 = sbr.rel (0) target = $region13
    $region12: #{transformer_block_forward.1} parent=1 // pred_region
      %s47 = ssub.s32 1024, 1024
      %48 = vsyncadd [#allocation6], %s47
      %s49 = sshll.u32 [#allocation7], 4
      %s50 = int_to_ptr.vmem [resolvable:$true] %s49
      %55 = dma.hbm_to_vmem [thread:$0]  %s2, 1024, %s50, [#allocation6], 128, 128, 8
    $region13: #{transformer_block_forward.1} parent=1 // pred_fallthru
      _
    // Predicated region
    $region14: #{transformer_block_forward.1} parent=1 // pred_check
      _
    $region15: #{transformer_block_forward.1} parent=1 // pred_check_branch
      %57 = sbr.rel (0) target = $region17
    $region16: #{transformer_block_forward.1} parent=1 // pred_region
      %s59 = ssub.s32 16, 16
      %60 = vsyncadd [#allocation9], %s59
      %s62 = sshll.u32 [#allocation8], 4
      %s63 = int_to_ptr.vmem [resolvable:$true] %s62
      %65 = dma.hbm_to_vmem [thread:$0]  %s3, 16, %s63, [#allocation9]
    $region17: #{transformer_block_forward.1} parent=1 // pred_fallthru
      _
    // Predicated region
    $region18: #{transformer_block_forward.1} parent=1 // pred_check
      _
    $region19: #{transformer_block_forward.1} parent=1 // pred_check_branch
      %67 = sbr.rel (0) target = $region21
    $region20: #{transformer_block_forward.1} parent=1 // pred_region
      %s69 = ssub.s32 16, 16
      %70 = vsyncadd [#allocation9], %s69
      %s72 = sshll.u32 [#allocation10], 4
      %s73 = int_to_ptr.vmem [resolvable:$true] %s72
      %75 = dma.hbm_to_vmem [thread:$0]  %s4, 16, %s73, [#allocation9]
    $region21: #{transformer_block_forward.1} parent=1 // pred_fallthru
      _
    // Predicated region
    $region22: #{transformer_block_forward.1} parent=1 // pred_check
      _
    $region23: #{transformer_block_forward.1} parent=1 // pred_check_branch
      %77 = sbr.rel (0) target = $region25
    $region24: #{transformer_block_forward.1} parent=1 // pred_region
      %s79 = ssub.s32 16, 16
      %80 = vsyncadd [#allocation12], %s79
      %s82 = sshll.u32 [#allocation11], 4
      %s83 = int_to_ptr.vmem [resolvable:$true] %s82
      %85 = dma.hbm_to_vmem [thread:$0]  %s5, 16, %s83, [#allocation12]
    $region25: #{transformer_block_forward.1} parent=1 // pred_fallthru
      _
    // Predicated region
    $region26: #{transformer_block_forward.1} parent=1 // pred_check
      _
    $region27: #{transformer_block_forward.1} parent=1 // pred_check_branch
      %87 = sbr.rel (0) target = $region29
    $region28: #{transformer_block_forward.1} parent=1 // pred_region
      %s89 = ssub.s32 512, 512
      %90 = vsyncadd [#allocation12], %s89
      %s91 = sshll.u32 [#allocation13], 4
      %s92 = int_to_ptr.vmem [resolvable:$true] %s91
      %97 = dma.hbm_to_vmem [thread:$0]  %s6, 512, %s92, [#allocation12], 128, 128, 8
    $region29: #{transformer_block_forward.1} parent=1 // pred_fallthru
      _
    // Predicated region
    $region30: #{transformer_block_forward.1} parent=1 // pred_check
      _
    $region31: #{transformer_block_forward.1} parent=1 // pred_check_branch
      %99 = sbr.rel (0) target = $region33
    $region32: #{transformer_block_forward.1} parent=1 // pred_region
      %s101 = ssub.s32 16, 16
      %102 = vsyncadd [#allocation15], %s101
      %s104 = sshll.u32 [#allocation14], 4
      %s105 = int_to_ptr.vmem [resolvable:$true] %s104
      %107 = dma.hbm_to_vmem [thread:$0]  %s7, 16, %s105, [#allocation15]
    $region33: #{transformer_block_forward.1} parent=1 // pred_fallthru
      _
    // Predicated region
    $region34: #{transformer_block_forward.1} parent=1 // pred_check
      _
    $region35: #{transformer_block_forward.1} parent=1 // pred_check_branch
      %109 = sbr.rel (0) target = $region37
    $region36: #{transformer_block_forward.1} parent=1 // pred_region
      %s111 = ssub.s32 16, 16
      %112 = vsyncadd [#allocation15], %s111
      %s114 = sshll.u32 [#allocation16], 4
      %s115 = int_to_ptr.vmem [resolvable:$true] %s114
      %117 = dma.hbm_to_vmem [thread:$0]  %s8, 16, %s115, [#allocation15]
    $region37: #{transformer_block_forward.1} parent=1 // pred_fallthru
      _
    // Predicated region
    $region38: #{transformer_block_forward.1} parent=1 // pred_check
      _
    $region39: #{transformer_block_forward.1} parent=1 // pred_check_branch
      %119 = sbr.rel (0) target = $region41
    $region40: #{transformer_block_forward.1} parent=1 // pred_region
      %120 = dma.done [#allocation3], 512
    $region41: #{transformer_block_forward.1} parent=1 // pred_fallthru
      _
    // Predicated region
    $region42: #{transformer_block_forward.1} parent=1 // pred_check
      _
    $region43: #{transformer_block_forward.1} parent=1 // pred_check_branch
      %122 = sbr.rel (0) target = $region45
    $region44: #{transformer_block_forward.1} parent=1 // pred_region
      %123 = dma.done [#allocation6], 1024
    $region45: #{transformer_block_forward.1} parent=1 // pred_fallthru
      _
    // Predicated region
    $region46: #{transformer_block_forward.1} parent=1 // pred_check
      _
    $region47: #{transformer_block_forward.1} parent=1 // pred_check_branch
      %125 = sbr.rel (0) target = $region49
    $region48: #{transformer_block_forward.1} parent=1 // pred_region
      %126 = dma.done [#allocation6], 1024
    $region49: #{transformer_block_forward.1} parent=1 // pred_fallthru
      _
    // Predicated region
    $region50: #{transformer_block_forward.1} parent=1 // pred_check
      _
    $region51: #{transformer_block_forward.1} parent=1 // pred_check_branch
      %128 = sbr.rel (0) target = $region53
    $region52: #{transformer_block_forward.1} parent=1 // pred_region
      %129 = dma.done [#allocation9], 16
    $region53: #{transformer_block_forward.1} parent=1 // pred_fallthru
      _
    // Predicated region
    $region54: #{transformer_block_forward.1} parent=1 // pred_check
      _
    $region55: #{transformer_block_forward.1} parent=1 // pred_check_branch
      %131 = sbr.rel (0) target = $region57
    $region56: #{transformer_block_forward.1} parent=1 // pred_region
      %132 = dma.done [#allocation9], 16
    $region57: #{transformer_block_forward.1} parent=1 // pred_fallthru
      _
    // Predicated region
    $region58: #{transformer_block_forward.1} parent=1 // pred_check
      _
    $region59: #{transformer_block_forward.1} parent=1 // pred_check_branch
      %134 = sbr.rel (0) target = $region61
    $region60: #{transformer_block_forward.1} parent=1 // pred_region
      %135 = dma.done [#allocation12], 16
    $region61: #{transformer_block_forward.1} parent=1 // pred_fallthru
      _
    // Predicated region
    $region62: #{transformer_block_forward.1} parent=1 // pred_check
      _
    $region63: #{transformer_block_forward.1} parent=1 // pred_check_branch
      %137 = sbr.rel (0) target = $region65
    $region64: #{transformer_block_forward.1} parent=1 // pred_region
      %138 = dma.done [#allocation12], 512
    $region65: #{transformer_block_forward.1} parent=1 // pred_fallthru
      _
    // Predicated region
    $region66: #{transformer_block_forward.1} parent=1 // pred_check
      _
    $region67: #{transformer_block_forward.1} parent=1 // pred_check_branch
      %140 = sbr.rel (0) target = $region69
    $region68: #{transformer_block_forward.1} parent=1 // pred_region
      %141 = dma.done [#allocation15], 16
    $region69: #{transformer_block_forward.1} parent=1 // pred_fallthru
      _
    // Predicated region
    $region70: #{transformer_block_forward.1} parent=1 // pred_check
      _
    $region71: #{transformer_block_forward.1} parent=1 // pred_check_branch
      %143 = sbr.rel (0) target = $region73
    $region72: #{transformer_block_forward.1} parent=1 // pred_region
      %144 = dma.done [#allocation15], 16
    $region73: #{transformer_block_forward.1} parent=1 // pred_fallthru
      _
    %v145 = vld [vmem:[#allocation2] sm:$0xff]
    %v146 = vld [vmem:[#allocation2 + $0x8] sm:$0xff]
    %v147 = vld [vmem:[#allocation2 + $0x10] sm:$0xff]
    %v148 = vld [vmem:[#allocation2 + $0x18] sm:$0xff]
    %v149 = vld [vmem:[#allocation5] sm:$0xff]
    %v150 = vld [vmem:[#allocation5 + $0x8] sm:$0xff]
    %v151 = vld [vmem:[#allocation5 + $0x10] sm:$0xff]
    %v152 = vld [vmem:[#allocation5 + $0x18] sm:$0xff]
    %v153 = vld [vmem:[#allocation5 + $0x20] sm:$0xff]
    %v154 = vld [vmem:[#allocation5 + $0x28] sm:$0xff]
    %v155 = vld [vmem:[#allocation5 + $0x30] sm:$0xff]
    %v156 = vld [vmem:[#allocation5 + $0x38] sm:$0xff]
    %vm157 = vcmask 261120
    %v159 = vsel %vm157, %v145, 0
    %v162 = vsel %vm157, %v146, 0
    %v165 = vsel %vm157, %v147, 0
    %v168 = vsel %vm157, %v148, 0
    %170 = vmatprep.subr.mxu0 %v150
    %171 = vmatpush1.msra.mxu0 %v149
    %172 = vmatprep.subr.mxu0 %v152
    %173 = vmatpush1.msra.mxu0 %v151
    %174 = vmatprep.subr.mxu0 %v154
    %175 = vmatpush1.msra.mxu0 %v153
    %176 = vmatprep.subr.mxu0 %v156
    %177 = vmatpush1.msra.mxu0 %v155
    %178 = vmatprep.subr.mxu0 0.0
    %179 = vmatpush1.msra.mxu0 0.0
    %180 = vmatprep.subr.mxu0 0.0
    %181 = vmatpush1.msra.mxu0 0.0
    %182 = vmatprep.subr.mxu0 0.0
    %183 = vmatpush1.msra.mxu0 0.0
    %184 = vmatprep.subr.mxu0 0.0
    %185 = vmatpush1.msra.mxu0 0.0
    %186 = vmatprep.subr.mxu0 0.0
    %187 = vmatpush1.msra.mxu0 0.0
    %188 = vmatprep.subr.mxu0 0.0
    %189 = vmatpush1.msra.mxu0 0.0
    %190 = vmatprep.subr.mxu0 0.0
    %191 = vmatpush1.msra.mxu0 0.0
    %192 = vmatprep.subr.mxu0 0.0
    %193 = vmatpush1.msra.mxu0 0.0
    %194 = vmatprep.subr.mxu0 0.0
    %195 = vmatpush1.msra.mxu0 0.0
    %196 = vmatprep.subr.mxu0 0.0
    %197 = vmatpush1.msra.mxu0 0.0
    %198 = vmatprep.subr.mxu0 0.0
    %199 = vmatpush1.msra.mxu0 0.0
    %200 = vmatprep.subr.mxu0 0.0
    %201 = vmatpush1.msra.mxu0 0.0
    %202 = vmatprep.subr.mxu0 0.0
    %203 = vmatpush1.msra.mxu0 0.0
    %204 = vmatprep.subr.mxu0 0.0
    %205 = vmatpush1.msra.mxu0 0.0
    %206 = vmatprep.subr.mxu0 0.0
    %207 = vmatpush1.msra.mxu0 0.0
    %208 = vmatprep.subr.mxu0 0.0
    %209 = vmatpush1.msra.mxu0 0.0
    %210 = vmatprep.subr.mxu0 0.0
    %211 = vmatpush1.msra.mxu0 0.0
    %212 = vmatprep.subr.mxu0 0.0
    %213 = vmatpush1.msra.mxu0 0.0
    %214 = vmatprep.subr.mxu0 0.0
    %215 = vmatpush1.msra.mxu0 0.0
    %216 = vmatprep.subr.mxu0 0.0
    %217 = vmatpush1.msra.mxu0 0.0
    %218 = vmatprep.subr.mxu0 0.0
    %219 = vmatpush1.msra.mxu0 0.0
    %220 = vmatprep.subr.mxu0 0.0
    %221 = vmatpush1.msra.mxu0 0.0
    %222 = vmatprep.subr.mxu0 0.0
    %223 = vmatpush1.msra.mxu0 0.0
    %224 = vmatprep.subr.mxu0 0.0
    %225 = vmatpush1.msra.mxu0 0.0
    %226 = vmatprep.subr.mxu0 0.0
    %227 = vmatpush1.msra.mxu0 0.0
    %228 = vmatprep.subr.mxu0 0.0
    %229 = vmatpush1.msra.mxu0 0.0
    %230 = vmatprep.subr.mxu0 0.0
    %231 = vmatpush1.msra.mxu0 0.0
    %232 = vmatprep.subr.mxu0 0.0
    %233 = vmatpush1.msra.mxu0 0.0
    %234 = vmatprep.mubr.f32.mxu0 0.0
    %235 = vmatmul.mubr.f32.gmra.mrb[0].mxu0 %v159
    %v236 = vpop.f32.mrb[0].mxu0
    %v237 = vadd.f32 0.0, %v236
    %v238 = vpop.f32.mrb[0].mxu0
    %v239 = vadd.f32 0.0, %v238
    %240 = vmatprep.mubr.f32.mxu0 0.0
    %241 = vmatmul.mubr.f32.gmra.mrb[0].mxu0 %v162
    %v242 = vpop.f32.mrb[0].mxu0
    %v243 = vadd.f32 0.0, %v242
    %v244 = vpop.f32.mrb[0].mxu0
    %v245 = vadd.f32 0.0, %v244
    %246 = vmatprep.mubr.f32.mxu0 0.0
    %247 = vmatmul.mubr.f32.gmra.mrb[0].mxu0 %v165
    %v248 = vpop.f32.mrb[0].mxu0
    %v249 = vadd.f32 0.0, %v248
    %v250 = vpop.f32.mrb[0].mxu0
    %v251 = vadd.f32 0.0, %v250
    %252 = vmatprep.mubr.f32.mxu0 0.0
    %253 = vmatmul.mubr.f32.gmra.mrb[0].mxu0 %v168
    %v254 = vpop.f32.mrb[0].mxu0
    %v255 = vadd.f32 0.0, %v254
    %v256 = vpop.f32.mrb[0].mxu0
    %v257 = vadd.f32 0.0, %v256
    %258 = vdwg.mxu0
    %261 = vrot.lane.b32.xlu0 %v237, 64
    %v262 = vpop.permute.xlu0 %261
    %263 = vrot.lane.b32.xlu0 %v243, 64
    %v264 = vpop.permute.xlu0 %263
    %v265 = vsel %vm157, %v237, 0
    %v267 = vsel %vm157, %v243, 0
    %v269 = vsel %vm157, %v262, 0
    %v271 = vsel %vm157, %v264, 0
    %273 = vmatprep.subr.mxu0 0.0
    %274 = vmatpush1.xpose.msra.mxu0 %v269
    %275 = vmatprep.subr.mxu0 0.0
    %276 = vmatpush1.xpose.msra.mxu0 %v271
    %277 = vmatprep.subr.mxu0 0.0
    %278 = vmatpush1.xpose.msra.mxu0 0.0
    %279 = vmatprep.subr.mxu0 0.0
    %280 = vmatpush1.xpose.msra.mxu0 0.0
    %281 = vmatprep.subr.mxu0 0.0
    %282 = vmatpush1.xpose.msra.mxu0 0.0
    %283 = vmatprep.subr.mxu0 0.0
    %284 = vmatpush1.xpose.msra.mxu0 0.0
    %285 = vmatprep.subr.mxu0 0.0
    %286 = vmatpush1.xpose.msra.mxu0 0.0
    %287 = vmatprep.subr.mxu0 0.0
    %288 = vmatpush1.xpose.msra.mxu0 0.0
    %289 = vmatprep.subr.mxu0 0.0
    %290 = vmatpush1.xpose.msra.mxu0 0.0
    %291 = vmatprep.subr.mxu0 0.0
    %292 = vmatpush1.xpose.msra.mxu0 0.0
    %293 = vmatprep.subr.mxu0 0.0
    %294 = vmatpush1.xpose.msra.mxu0 0.0
    %295 = vmatprep.subr.mxu0 0.0
    %296 = vmatpush1.xpose.msra.mxu0 0.0
    %297 = vmatprep.subr.mxu0 0.0
    %298 = vmatpush1.xpose.msra.mxu0 0.0
    %299 = vmatprep.subr.mxu0 0.0
    %300 = vmatpush1.xpose.msra.mxu0 0.0
    %301 = vmatprep.subr.mxu0 0.0
    %302 = vmatpush1.xpose.msra.mxu0 0.0
    %303 = vmatprep.subr.mxu0 0.0
    %304 = vmatpush1.xpose.msra.mxu0 0.0
    %305 = vmatprep.subr.mxu0 0.0
    %306 = vmatpush1.xpose.msra.mxu0 0.0
    %307 = vmatprep.subr.mxu0 0.0
    %308 = vmatpush1.xpose.msra.mxu0 0.0
    %309 = vmatprep.subr.mxu0 0.0
    %310 = vmatpush1.xpose.msra.mxu0 0.0
    %311 = vmatprep.subr.mxu0 0.0
    %312 = vmatpush1.xpose.msra.mxu0 0.0
    %313 = vmatprep.subr.mxu0 0.0
    %314 = vmatpush1.xpose.msra.mxu0 0.0
    %315 = vmatprep.subr.mxu0 0.0
    %316 = vmatpush1.xpose.msra.mxu0 0.0
    %317 = vmatprep.subr.mxu0 0.0
    %318 = vmatpush1.xpose.msra.mxu0 0.0
    %319 = vmatprep.subr.mxu0 0.0
    %320 = vmatpush1.xpose.msra.mxu0 0.0
    %321 = vmatprep.subr.mxu0 0.0
    %322 = vmatpush1.xpose.msra.mxu0 0.0
    %323 = vmatprep.subr.mxu0 0.0
    %324 = vmatpush1.xpose.msra.mxu0 0.0
    %325 = vmatprep.subr.mxu0 0.0
    %326 = vmatpush1.xpose.msra.mxu0 0.0
    %327 = vmatprep.subr.mxu0 0.0
    %328 = vmatpush1.xpose.msra.mxu0 0.0
    %329 = vmatprep.subr.mxu0 0.0
    %330 = vmatpush1.xpose.msra.mxu0 0.0
    %331 = vmatprep.subr.mxu0 0.0
    %332 = vmatpush1.xpose.msra.mxu0 0.0
    %333 = vmatprep.subr.mxu0 0.0
    %334 = vmatpush1.xpose.msra.mxu0 0.0
    %335 = vmatprep.subr.mxu0 0.0
    %336 = vmatpush1.xpose.msra.mxu0 0.0
    %337 = vmatprep.mubr.f32.mxu0 0.0
    %338 = vmatmul.mubr.f32.gmra.mrb[0].mxu0 %v265
    %v339 = vpop.f32.mrb[0].mxu0
    %v340 = vadd.f32 0.0, %v339
    %v341 = vpop.f32.mrb[0].mxu0
    %342 = vmatprep.mubr.f32.mxu0 0.0
    %343 = vmatmul.mubr.f32.gmra.mrb[0].mxu0 %v267
    %v344 = vpop.f32.mrb[0].mxu0
    %v345 = vadd.f32 0.0, %v344
    %v346 = vpop.f32.mrb[0].mxu0
    %347 = vdwg.mxu0
    %vm348 = vcmask 130048
    %v349 = vsel %vm348, %v340, -inf
    %350 = vmax.xlane.f32.xlu0 %v349
    %v351 = vpop.xlane.xlu0 %350
    %v352 = vsel %vm348, %v345, -inf
    %353 = vmax.xlane.f32.xlu0 %v352
    %v354 = vpop.xlane.xlu0 %353
    %v355 = vsub.f32 %v340, %v351
    %v356 = vsub.f32 %v345, %v354
    %v357 = vmul.f32 %v355, 1.442695
    %v358 = vpow.pop %v357
    %v359 = vmul.f32 %v356, 1.442695
    %v360 = vpow.pop %v359
    %v361 = vsel %vm348, %v358, 0.0
    %362 = vadd.xlane.f32.xlu0 %v361
    %v363 = vpop.xlane.xlu0 %362
    %v364 = vsel %vm348, %v360, 0.0
    %365 = vadd.xlane.f32.xlu0 %v364
    %v366 = vpop.xlane.xlu0 %365
    %v367 = vrcp.pop %v363
    %v368 = vrcp.pop %v366
    %v369 = vmul.f32 %v358, %v367
    %v370 = vmul.f32 %v360, %v368
    %v372 = vsel %vm348, %v369, 0
    %v375 = vsel %vm348, %v370, 0
    %377 = vmatprep.subr.mxu0 0.0
    %378 = vmatpush1.msra.mxu0 %v239
    %379 = vmatprep.subr.mxu0 0.0
    %380 = vmatpush1.msra.mxu0 %v245
    %381 = vmatprep.subr.mxu0 0.0
    %382 = vmatpush1.msra.mxu0 0.0
    %383 = vmatprep.subr.mxu0 0.0
    %384 = vmatpush1.msra.mxu0 0.0
    %385 = vmatprep.subr.mxu0 0.0
    %386 = vmatpush1.msra.mxu0 0.0
    %387 = vmatprep.subr.mxu0 0.0
    %388 = vmatpush1.msra.mxu0 0.0
    %389 = vmatprep.subr.mxu0 0.0
    %390 = vmatpush1.msra.mxu0 0.0
    %391 = vmatprep.subr.mxu0 0.0
    %392 = vmatpush1.msra.mxu0 0.0
    %393 = vmatprep.subr.mxu0 0.0
    %394 = vmatpush1.msra.mxu0 0.0
    %395 = vmatprep.subr.mxu0 0.0
    %396 = vmatpush1.msra.mxu0 0.0
    %397 = vmatprep.subr.mxu0 0.0
    %398 = vmatpush1.msra.mxu0 0.0
    %399 = vmatprep.subr.mxu0 0.0
    %400 = vmatpush1.msra.mxu0 0.0
    %401 = vmatprep.subr.mxu0 0.0
    %402 = vmatpush1.msra.mxu0 0.0
    %403 = vmatprep.subr.mxu0 0.0
    %404 = vmatpush1.msra.mxu0 0.0
    %405 = vmatprep.subr.mxu0 0.0
    %406 = vmatpush1.msra.mxu0 0.0
    %407 = vmatprep.subr.mxu0 0.0
    %408 = vmatpush1.msra.mxu0 0.0
    %409 = vmatprep.subr.mxu0 0.0
    %410 = vmatpush1.msra.mxu0 0.0
    %411 = vmatprep.subr.mxu0 0.0
    %412 = vmatpush1.msra.mxu0 0.0
    %413 = vmatprep.subr.mxu0 0.0
    %414 = vmatpush1.msra.mxu0 0.0
    %415 = vmatprep.subr.mxu0 0.0
    %416 = vmatpush1.msra.mxu0 0.0
    %417 = vmatprep.subr.mxu0 0.0
    %418 = vmatpush1.msra.mxu0 0.0
    %419 = vmatprep.subr.mxu0 0.0
    %420 = vmatpush1.msra.mxu0 0.0
    %421 = vmatprep.subr.mxu0 0.0
    %422 = vmatpush1.msra.mxu0 0.0
    %423 = vmatprep.subr.mxu0 0.0
    %424 = vmatpush1.msra.mxu0 0.0
    %425 = vmatprep.subr.mxu0 0.0
    %426 = vmatpush1.msra.mxu0 0.0
    %427 = vmatprep.subr.mxu0 0.0
    %428 = vmatpush1.msra.mxu0 0.0
    %429 = vmatprep.subr.mxu0 0.0
    %430 = vmatpush1.msra.mxu0 0.0
    %431 = vmatprep.subr.mxu0 0.0
    %432 = vmatpush1.msra.mxu0 0.0
    %433 = vmatprep.subr.mxu0 0.0
    %434 = vmatpush1.msra.mxu0 0.0
    %435 = vmatprep.subr.mxu0 0.0
    %436 = vmatpush1.msra.mxu0 0.0
    %437 = vmatprep.subr.mxu0 0.0
    %438 = vmatpush1.msra.mxu0 0.0
    %439 = vmatprep.subr.mxu0 0.0
    %440 = vmatpush1.msra.mxu0 0.0
    %441 = vmatprep.mubr.f32.mxu0 0.0
    %442 = vmatmul.mubr.f32.gmra.mrb[0].mxu0 %v372
    %v443 = vpop.f32.mrb[0].mxu0
    %v444 = vadd.f32 0.0, %v443
    %v445 = vpop.f32.mrb[0].mxu0
    %446 = vmatprep.mubr.f32.mxu0 0.0
    %447 = vmatmul.mubr.f32.gmra.mrb[0].mxu0 %v375
    %v448 = vpop.f32.mrb[0].mxu0
    %v449 = vadd.f32 0.0, %v448
    %v450 = vpop.f32.mrb[0].mxu0
    %451 = vdwg.mxu0
    %452 = vrot.lane.b32.xlu0 %v237, 96
    %v453 = vpop.permute.xlu0 %452
    %454 = vrot.lane.b32.xlu0 %v243, 96
    %v455 = vpop.permute.xlu0 %454
    %456 = vrot.lane.b32.xlu0 %v237, 32
    %v457 = vpop.permute.xlu0 %456
    %458 = vrot.lane.b32.xlu0 %v243, 32
    %v459 = vpop.permute.xlu0 %458
    %v460 = vsel %vm157, %v453, 0
    %v462 = vsel %vm157, %v455, 0
    %v464 = vsel %vm157, %v457, 0
    %v466 = vsel %vm157, %v459, 0
    %468 = vmatprep.subr.mxu0 0.0
    %469 = vmatpush1.xpose.msra.mxu0 %v464
    %470 = vmatprep.subr.mxu0 0.0
    %471 = vmatpush1.xpose.msra.mxu0 %v466
    %472 = vmatprep.subr.mxu0 0.0
    %473 = vmatpush1.xpose.msra.mxu0 0.0
    %474 = vmatprep.subr.mxu0 0.0
    %475 = vmatpush1.xpose.msra.mxu0 0.0
    %476 = vmatprep.subr.mxu0 0.0
    %477 = vmatpush1.xpose.msra.mxu0 0.0
    %478 = vmatprep.subr.mxu0 0.0
    %479 = vmatpush1.xpose.msra.mxu0 0.0
    %480 = vmatprep.subr.mxu0 0.0
    %481 = vmatpush1.xpose.msra.mxu0 0.0
    %482 = vmatprep.subr.mxu0 0.0
    %483 = vmatpush1.xpose.msra.mxu0 0.0
    %484 = vmatprep.subr.mxu0 0.0
    %485 = vmatpush1.xpose.msra.mxu0 0.0
    %486 = vmatprep.subr.mxu0 0.0
    %487 = vmatpush1.xpose.msra.mxu0 0.0
    %488 = vmatprep.subr.mxu0 0.0
    %489 = vmatpush1.xpose.msra.mxu0 0.0
    %490 = vmatprep.subr.mxu0 0.0
    %491 = vmatpush1.xpose.msra.mxu0 0.0
    %492 = vmatprep.subr.mxu0 0.0
    %493 = vmatpush1.xpose.msra.mxu0 0.0
    %494 = vmatprep.subr.mxu0 0.0
    %495 = vmatpush1.xpose.msra.mxu0 0.0
    %496 = vmatprep.subr.mxu0 0.0
    %497 = vmatpush1.xpose.msra.mxu0 0.0
    %498 = vmatprep.subr.mxu0 0.0
    %499 = vmatpush1.xpose.msra.mxu0 0.0
    %500 = vmatprep.subr.mxu0 0.0
    %501 = vmatpush1.xpose.msra.mxu0 0.0
    %502 = vmatprep.subr.mxu0 0.0
    %503 = vmatpush1.xpose.msra.mxu0 0.0
    %504 = vmatprep.subr.mxu0 0.0
    %505 = vmatpush1.xpose.msra.mxu0 0.0
    %506 = vmatprep.subr.mxu0 0.0
    %507 = vmatpush1.xpose.msra.mxu0 0.0
    %508 = vmatprep.subr.mxu0 0.0
    %509 = vmatpush1.xpose.msra.mxu0 0.0
    %510 = vmatprep.subr.mxu0 0.0
    %511 = vmatpush1.xpose.msra.mxu0 0.0
    %512 = vmatprep.subr.mxu0 0.0
    %513 = vmatpush1.xpose.msra.mxu0 0.0
    %514 = vmatprep.subr.mxu0 0.0
    %515 = vmatpush1.xpose.msra.mxu0 0.0
    %516 = vmatprep.subr.mxu0 0.0
    %517 = vmatpush1.xpose.msra.mxu0 0.0
    %518 = vmatprep.subr.mxu0 0.0
    %519 = vmatpush1.xpose.msra.mxu0 0.0
    %520 = vmatprep.subr.mxu0 0.0
    %521 = vmatpush1.xpose.msra.mxu0 0.0
    %522 = vmatprep.subr.mxu0 0.0
    %523 = vmatpush1.xpose.msra.mxu0 0.0
    %524 = vmatprep.subr.mxu0 0.0
    %525 = vmatpush1.xpose.msra.mxu0 0.0
    %526 = vmatprep.subr.mxu0 0.0
    %527 = vmatpush1.xpose.msra.mxu0 0.0
    %528 = vmatprep.subr.mxu0 0.0
    %529 = vmatpush1.xpose.msra.mxu0 0.0
    %530 = vmatprep.subr.mxu0 0.0
    %531 = vmatpush1.xpose.msra.mxu0 0.0
    %532 = vmatprep.mubr.f32.mxu0 0.0
    %533 = vmatmul.mubr.f32.gmra.mrb[0].mxu0 %v460
    %v534 = vpop.f32.mrb[0].mxu0
    %v535 = vadd.f32 0.0, %v534
    %v536 = vpop.f32.mrb[0].mxu0
    %537 = vmatprep.mubr.f32.mxu0 0.0
    %538 = vmatmul.mubr.f32.gmra.mrb[0].mxu0 %v462
    %v539 = vpop.f32.mrb[0].mxu0
    %v540 = vadd.f32 0.0, %v539
    %v541 = vpop.f32.mrb[0].mxu0
    %542 = vdwg.mxu0
    %v543 = vsel %vm348, %v535, -inf
    %544 = vmax.xlane.f32.xlu0 %v543
    %v545 = vpop.xlane.xlu0 %544
    %v546 = vsel %vm348, %v540, -inf
    %547 = vmax.xlane.f32.xlu0 %v546
    %v548 = vpop.xlane.xlu0 %547
    %v549 = vsub.f32 %v535, %v545
    %v550 = vsub.f32 %v540, %v548
    %v551 = vmul.f32 %v549, 1.442695
    %v552 = vpow.pop %v551
    %v553 = vmul.f32 %v550, 1.442695
    %v554 = vpow.pop %v553
    %v555 = vsel %vm348, %v552, 0.0
    %556 = vadd.xlane.f32.xlu0 %v555
    %v557 = vpop.xlane.xlu0 %556
    %v558 = vsel %vm348, %v554, 0.0
    %559 = vadd.xlane.f32.xlu0 %v558
    %v560 = vpop.xlane.xlu0 %559
    %v561 = vrcp.pop %v557
    %v562 = vrcp.pop %v560
    %v563 = vmul.f32 %v552, %v561
    %v564 = vmul.f32 %v554, %v562
    %567 = vrot.lane.b32.xlu0 %v239, 96
    %v568 = vpop.permute.xlu0 %567
    %569 = vrot.lane.b32.xlu0 %v245, 96
    %v570 = vpop.permute.xlu0 %569
    %v574 = vsel %vm348, %v563, 0
    %v577 = vsel %vm348, %v564, 0
    %579 = vmatprep.subr.mxu0 0.0
    %580 = vmatpush1.msra.mxu0 %v568
    %581 = vmatprep.subr.mxu0 0.0
    %582 = vmatpush1.msra.mxu0 %v570
    %583 = vmatprep.subr.mxu0 0.0
    %584 = vmatpush1.msra.mxu0 0.0
    %585 = vmatprep.subr.mxu0 0.0
    %586 = vmatpush1.msra.mxu0 0.0
    %587 = vmatprep.subr.mxu0 0.0
    %588 = vmatpush1.msra.mxu0 0.0
    %589 = vmatprep.subr.mxu0 0.0
    %590 = vmatpush1.msra.mxu0 0.0
    %591 = vmatprep.subr.mxu0 0.0
    %592 = vmatpush1.msra.mxu0 0.0
    %593 = vmatprep.subr.mxu0 0.0
    %594 = vmatpush1.msra.mxu0 0.0
    %595 = vmatprep.subr.mxu0 0.0
    %596 = vmatpush1.msra.mxu0 0.0
    %597 = vmatprep.subr.mxu0 0.0
    %598 = vmatpush1.msra.mxu0 0.0
    %599 = vmatprep.subr.mxu0 0.0
    %600 = vmatpush1.msra.mxu0 0.0
    %601 = vmatprep.subr.mxu0 0.0
    %602 = vmatpush1.msra.mxu0 0.0
    %603 = vmatprep.subr.mxu0 0.0
    %604 = vmatpush1.msra.mxu0 0.0
    %605 = vmatprep.subr.mxu0 0.0
    %606 = vmatpush1.msra.mxu0 0.0
    %607 = vmatprep.subr.mxu0 0.0
    %608 = vmatpush1.msra.mxu0 0.0
    %609 = vmatprep.subr.mxu0 0.0
    %610 = vmatpush1.msra.mxu0 0.0
    %611 = vmatprep.subr.mxu0 0.0
    %612 = vmatpush1.msra.mxu0 0.0
    %613 = vmatprep.subr.mxu0 0.0
    %614 = vmatpush1.msra.mxu0 0.0
    %615 = vmatprep.subr.mxu0 0.0
    %616 = vmatpush1.msra.mxu0 0.0
    %617 = vmatprep.subr.mxu0 0.0
    %618 = vmatpush1.msra.mxu0 0.0
    %619 = vmatprep.subr.mxu0 0.0
    %620 = vmatpush1.msra.mxu0 0.0
    %621 = vmatprep.subr.mxu0 0.0
    %622 = vmatpush1.msra.mxu0 0.0
    %623 = vmatprep.subr.mxu0 0.0
    %624 = vmatpush1.msra.mxu0 0.0
    %625 = vmatprep.subr.mxu0 0.0
    %626 = vmatpush1.msra.mxu0 0.0
    %627 = vmatprep.subr.mxu0 0.0
    %628 = vmatpush1.msra.mxu0 0.0
    %629 = vmatprep.subr.mxu0 0.0
    %630 = vmatpush1.msra.mxu0 0.0
    %631 = vmatprep.subr.mxu0 0.0
    %632 = vmatpush1.msra.mxu0 0.0
    %633 = vmatprep.subr.mxu0 0.0
    %634 = vmatpush1.msra.mxu0 0.0
    %635 = vmatprep.subr.mxu0 0.0
    %636 = vmatpush1.msra.mxu0 0.0
    %637 = vmatprep.subr.mxu0 0.0
    %638 = vmatpush1.msra.mxu0 0.0
    %639 = vmatprep.subr.mxu0 0.0
    %640 = vmatpush1.msra.mxu0 0.0
    %641 = vmatprep.subr.mxu0 0.0
    %642 = vmatpush1.msra.mxu0 0.0
    %643 = vmatprep.mubr.f32.mxu0 0.0
    %644 = vmatmul.mubr.f32.gmra.mrb[0].mxu0 %v574
    %v645 = vpop.f32.mrb[0].mxu0
    %v646 = vadd.f32 0.0, %v645
    %v647 = vpop.f32.mrb[0].mxu0
    %648 = vmatprep.mubr.f32.mxu0 0.0
    %649 = vmatmul.mubr.f32.gmra.mrb[0].mxu0 %v577
    %v650 = vpop.f32.mrb[0].mxu0
    %v651 = vadd.f32 0.0, %v650
    %v652 = vpop.f32.mrb[0].mxu0
    %653 = vdwg.mxu0
    %656 = vrot.lane.b32.xlu0 %v646, 32
    %v657 = vpop.permute.xlu0 %656
    %658 = vrot.lane.b32.xlu0 %v651, 32
    %v659 = vpop.permute.xlu0 %658
    %v662 = vsel %vm157, %v444, %v657
    %v663 = vsel %vm157, %v449, %v659
    %666 = vrot.lane.b32.xlu0 %v249, 64
    %v667 = vpop.permute.xlu0 %666
    %668 = vrot.lane.b32.xlu0 %v255, 64
    %v669 = vpop.permute.xlu0 %668
    %v670 = vsel %vm157, %v249, 0
    %v672 = vsel %vm157, %v255, 0
    %v674 = vsel %vm157, %v667, 0
    %v676 = vsel %vm157, %v669, 0
    %678 = vmatprep.subr.mxu0 0.0
    %679 = vmatpush1.xpose.msra.mxu0 %v674
    %680 = vmatprep.subr.mxu0 0.0
    %681 = vmatpush1.xpose.msra.mxu0 %v676
    %682 = vmatprep.subr.mxu0 0.0
    %683 = vmatpush1.xpose.msra.mxu0 0.0
    %684 = vmatprep.subr.mxu0 0.0
    %685 = vmatpush1.xpose.msra.mxu0 0.0
    %686 = vmatprep.subr.mxu0 0.0
    %687 = vmatpush1.xpose.msra.mxu0 0.0
    %688 = vmatprep.subr.mxu0 0.0
    %689 = vmatpush1.xpose.msra.mxu0 0.0
    %690 = vmatprep.subr.mxu0 0.0
    %691 = vmatpush1.xpose.msra.mxu0 0.0
    %692 = vmatprep.subr.mxu0 0.0
    %693 = vmatpush1.xpose.msra.mxu0 0.0
    %694 = vmatprep.subr.mxu0 0.0
    %695 = vmatpush1.xpose.msra.mxu0 0.0
    %696 = vmatprep.subr.mxu0 0.0
    %697 = vmatpush1.xpose.msra.mxu0 0.0
    %698 = vmatprep.subr.mxu0 0.0
    %699 = vmatpush1.xpose.msra.mxu0 0.0
    %700 = vmatprep.subr.mxu0 0.0
    %701 = vmatpush1.xpose.msra.mxu0 0.0
    %702 = vmatprep.subr.mxu0 0.0
    %703 = vmatpush1.xpose.msra.mxu0 0.0
    %704 = vmatprep.subr.mxu0 0.0
    %705 = vmatpush1.xpose.msra.mxu0 0.0
    %706 = vmatprep.subr.mxu0 0.0
    %707 = vmatpush1.xpose.msra.mxu0 0.0
    %708 = vmatprep.subr.mxu0 0.0
    %709 = vmatpush1.xpose.msra.mxu0 0.0
    %710 = vmatprep.subr.mxu0 0.0
    %711 = vmatpush1.xpose.msra.mxu0 0.0
    %712 = vmatprep.subr.mxu0 0.0
    %713 = vmatpush1.xpose.msra.mxu0 0.0
    %714 = vmatprep.subr.mxu0 0.0
    %715 = vmatpush1.xpose.msra.mxu0 0.0
    %716 = vmatprep.subr.mxu0 0.0
    %717 = vmatpush1.xpose.msra.mxu0 0.0
    %718 = vmatprep.subr.mxu0 0.0
    %719 = vmatpush1.xpose.msra.mxu0 0.0
    %720 = vmatprep.subr.mxu0 0.0
    %721 = vmatpush1.xpose.msra.mxu0 0.0
    %722 = vmatprep.subr.mxu0 0.0
    %723 = vmatpush1.xpose.msra.mxu0 0.0
    %724 = vmatprep.subr.mxu0 0.0
    %725 = vmatpush1.xpose.msra.mxu0 0.0
    %726 = vmatprep.subr.mxu0 0.0
    %727 = vmatpush1.xpose.msra.mxu0 0.0
    %728 = vmatprep.subr.mxu0 0.0
    %729 = vmatpush1.xpose.msra.mxu0 0.0
    %730 = vmatprep.subr.mxu0 0.0
    %731 = vmatpush1.xpose.msra.mxu0 0.0
    %732 = vmatprep.subr.mxu0 0.0
    %733 = vmatpush1.xpose.msra.mxu0 0.0
    %734 = vmatprep.subr.mxu0 0.0
    %735 = vmatpush1.xpose.msra.mxu0 0.0
    %736 = vmatprep.subr.mxu0 0.0
    %737 = vmatpush1.xpose.msra.mxu0 0.0
    %738 = vmatprep.subr.mxu0 0.0
    %739 = vmatpush1.xpose.msra.mxu0 0.0
    %740 = vmatprep.subr.mxu0 0.0
    %741 = vmatpush1.xpose.msra.mxu0 0.0
    %742 = vmatprep.mubr.f32.mxu0 0.0
    %743 = vmatmul.mubr.f32.gmra.mrb[0].mxu0 %v670
    %v744 = vpop.f32.mrb[0].mxu0
    %v745 = vadd.f32 0.0, %v744
    %v746 = vpop.f32.mrb[0].mxu0
    %747 = vmatprep.mubr.f32.mxu0 0.0
    %748 = vmatmul.mubr.f32.gmra.mrb[0].mxu0 %v672
    %v749 = vpop.f32.mrb[0].mxu0
    %v750 = vadd.f32 0.0, %v749
    %v751 = vpop.f32.mrb[0].mxu0
    %752 = vdwg.mxu0
    %v753 = vsel %vm348, %v745, -inf
    %754 = vmax.xlane.f32.xlu0 %v753
    %v755 = vpop.xlane.xlu0 %754
    %v756 = vsel %vm348, %v750, -inf
    %757 = vmax.xlane.f32.xlu0 %v756
    %v758 = vpop.xlane.xlu0 %757
    %v759 = vsub.f32 %v745, %v755
    %v760 = vsub.f32 %v750, %v758
    %v761 = vmul.f32 %v759, 1.442695
    %v762 = vpow.pop %v761
    %v763 = vmul.f32 %v760, 1.442695
    %v764 = vpow.pop %v763
    %v765 = vsel %vm348, %v762, 0.0
    %766 = vadd.xlane.f32.xlu0 %v765
    %v767 = vpop.xlane.xlu0 %766
    %v768 = vsel %vm348, %v764, 0.0
    %769 = vadd.xlane.f32.xlu0 %v768
    %v770 = vpop.xlane.xlu0 %769
    %v771 = vrcp.pop %v767
    %v772 = vrcp.pop %v770
    %v773 = vmul.f32 %v762, %v771
    %v774 = vmul.f32 %v764, %v772
    %v776 = vsel %vm348, %v773, 0
    %v779 = vsel %vm348, %v774, 0
    %781 = vmatprep.subr.mxu0 0.0
    %782 = vmatpush1.msra.mxu0 %v251
    %783 = vmatprep.subr.mxu0 0.0
    %784 = vmatpush1.msra.mxu0 %v257
    %785 = vmatprep.subr.mxu0 0.0
    %786 = vmatpush1.msra.mxu0 0.0
    %787 = vmatprep.subr.mxu0 0.0
    %788 = vmatpush1.msra.mxu0 0.0
    %789 = vmatprep.subr.mxu0 0.0
    %790 = vmatpush1.msra.mxu0 0.0
    %791 = vmatprep.subr.mxu0 0.0
    %792 = vmatpush1.msra.mxu0 0.0
    %793 = vmatprep.subr.mxu0 0.0
    %794 = vmatpush1.msra.mxu0 0.0
    %795 = vmatprep.subr.mxu0 0.0
    %796 = vmatpush1.msra.mxu0 0.0
    %797 = vmatprep.subr.mxu0 0.0
    %798 = vmatpush1.msra.mxu0 0.0
    %799 = vmatprep.subr.mxu0 0.0
    %800 = vmatpush1.msra.mxu0 0.0
    %801 = vmatprep.subr.mxu0 0.0
    %802 = vmatpush1.msra.mxu0 0.0
    %803 = vmatprep.subr.mxu0 0.0
    %804 = vmatpush1.msra.mxu0 0.0
    %805 = vmatprep.subr.mxu0 0.0
    %806 = vmatpush1.msra.mxu0 0.0
    %807 = vmatprep.subr.mxu0 0.0
    %808 = vmatpush1.msra.mxu0 0.0
    %809 = vmatprep.subr.mxu0 0.0
    %810 = vmatpush1.msra.mxu0 0.0
    %811 = vmatprep.subr.mxu0 0.0
    %812 = vmatpush1.msra.mxu0 0.0
    %813 = vmatprep.subr.mxu0 0.0
    %814 = vmatpush1.msra.mxu0 0.0
    %815 = vmatprep.subr.mxu0 0.0
    %816 = vmatpush1.msra.mxu0 0.0
    %817 = vmatprep.subr.mxu0 0.0
    %818 = vmatpush1.msra.mxu0 0.0
    %819 = vmatprep.subr.mxu0 0.0
    %820 = vmatpush1.msra.mxu0 0.0
    %821 = vmatprep.subr.mxu0 0.0
    %822 = vmatpush1.msra.mxu0 0.0
    %823 = vmatprep.subr.mxu0 0.0
    %824 = vmatpush1.msra.mxu0 0.0
    %825 = vmatprep.subr.mxu0 0.0
    %826 = vmatpush1.msra.mxu0 0.0
    %827 = vmatprep.subr.mxu0 0.0
    %828 = vmatpush1.msra.mxu0 0.0
    %829 = vmatprep.subr.mxu0 0.0
    %830 = vmatpush1.msra.mxu0 0.0
    %831 = vmatprep.subr.mxu0 0.0
    %832 = vmatpush1.msra.mxu0 0.0
    %833 = vmatprep.subr.mxu0 0.0
    %834 = vmatpush1.msra.mxu0 0.0
    %835 = vmatprep.subr.mxu0 0.0
    %836 = vmatpush1.msra.mxu0 0.0
    %837 = vmatprep.subr.mxu0 0.0
    %838 = vmatpush1.msra.mxu0 0.0
    %839 = vmatprep.subr.mxu0 0.0
    %840 = vmatpush1.msra.mxu0 0.0
    %841 = vmatprep.subr.mxu0 0.0
    %842 = vmatpush1.msra.mxu0 0.0
    %843 = vmatprep.subr.mxu0 0.0
    %844 = vmatpush1.msra.mxu0 0.0
    %845 = vmatprep.mubr.f32.mxu0 0.0
    %846 = vmatmul.mubr.f32.gmra.mrb[0].mxu0 %v776
    %v847 = vpop.f32.mrb[0].mxu0
    %v848 = vadd.f32 0.0, %v847
    %v849 = vpop.f32.mrb[0].mxu0
    %850 = vmatprep.mubr.f32.mxu0 0.0
    %851 = vmatmul.mubr.f32.gmra.mrb[0].mxu0 %v779
    %v852 = vpop.f32.mrb[0].mxu0
    %v853 = vadd.f32 0.0, %v852
    %v854 = vpop.f32.mrb[0].mxu0
    %855 = vdwg.mxu0
    %856 = vrot.lane.b32.xlu0 %v249, 96
    %v857 = vpop.permute.xlu0 %856
    %858 = vrot.lane.b32.xlu0 %v255, 96
    %v859 = vpop.permute.xlu0 %858
    %860 = vrot.lane.b32.xlu0 %v249, 32
    %v861 = vpop.permute.xlu0 %860
    %862 = vrot.lane.b32.xlu0 %v255, 32
    %v863 = vpop.permute.xlu0 %862
    %v864 = vsel %vm157, %v857, 0
    %v866 = vsel %vm157, %v859, 0
    %v868 = vsel %vm157, %v861, 0
    %v870 = vsel %vm157, %v863, 0
    %872 = vmatprep.subr.mxu0 0.0
    %873 = vmatpush1.xpose.msra.mxu0 %v868
    %874 = vmatprep.subr.mxu0 0.0
    %875 = vmatpush1.xpose.msra.mxu0 %v870
    %876 = vmatprep.subr.mxu0 0.0
    %877 = vmatpush1.xpose.msra.mxu0 0.0
    %878 = vmatprep.subr.mxu0 0.0
    %879 = vmatpush1.xpose.msra.mxu0 0.0
    %880 = vmatprep.subr.mxu0 0.0
    %881 = vmatpush1.xpose.msra.mxu0 0.0
    %882 = vmatprep.subr.mxu0 0.0
    %883 = vmatpush1.xpose.msra.mxu0 0.0
    %884 = vmatprep.subr.mxu0 0.0
    %885 = vmatpush1.xpose.msra.mxu0 0.0
    %886 = vmatprep.subr.mxu0 0.0
    %887 = vmatpush1.xpose.msra.mxu0 0.0
    %888 = vmatprep.subr.mxu0 0.0
    %889 = vmatpush1.xpose.msra.mxu0 0.0
    %890 = vmatprep.subr.mxu0 0.0
    %891 = vmatpush1.xpose.msra.mxu0 0.0
    %892 = vmatprep.subr.mxu0 0.0
    %893 = vmatpush1.xpose.msra.mxu0 0.0
    %894 = vmatprep.subr.mxu0 0.0
    %895 = vmatpush1.xpose.msra.mxu0 0.0
    %896 = vmatprep.subr.mxu0 0.0
    %897 = vmatpush1.xpose.msra.mxu0 0.0
    %898 = vmatprep.subr.mxu0 0.0
    %899 = vmatpush1.xpose.msra.mxu0 0.0
    %900 = vmatprep.subr.mxu0 0.0
    %901 = vmatpush1.xpose.msra.mxu0 0.0
    %902 = vmatprep.subr.mxu0 0.0
    %903 = vmatpush1.xpose.msra.mxu0 0.0
    %904 = vmatprep.subr.mxu0 0.0
    %905 = vmatpush1.xpose.msra.mxu0 0.0
    %906 = vmatprep.subr.mxu0 0.0
    %907 = vmatpush1.xpose.msra.mxu0 0.0
    %908 = vmatprep.subr.mxu0 0.0
    %909 = vmatpush1.xpose.msra.mxu0 0.0
    %910 = vmatprep.subr.mxu0 0.0
    %911 = vmatpush1.xpose.msra.mxu0 0.0
    %912 = vmatprep.subr.mxu0 0.0
    %913 = vmatpush1.xpose.msra.mxu0 0.0
    %914 = vmatprep.subr.mxu0 0.0
    %915 = vmatpush1.xpose.msra.mxu0 0.0
    %916 = vmatprep.subr.mxu0 0.0
    %917 = vmatpush1.xpose.msra.mxu0 0.0
    %918 = vmatprep.subr.mxu0 0.0
    %919 = vmatpush1.xpose.msra.mxu0 0.0
    %920 = vmatprep.subr.mxu0 0.0
    %921 = vmatpush1.xpose.msra.mxu0 0.0
    %922 = vmatprep.subr.mxu0 0.0
    %923 = vmatpush1.xpose.msra.mxu0 0.0
    %924 = vmatprep.subr.mxu0 0.0
    %925 = vmatpush1.xpose.msra.mxu0 0.0
    %926 = vmatprep.subr.mxu0 0.0
    %927 = vmatpush1.xpose.msra.mxu0 0.0
    %928 = vmatprep.subr.mxu0 0.0
    %929 = vmatpush1.xpose.msra.mxu0 0.0
    %930 = vmatprep.subr.mxu0 0.0
    %931 = vmatpush1.xpose.msra.mxu0 0.0
    %932 = vmatprep.subr.mxu0 0.0
    %933 = vmatpush1.xpose.msra.mxu0 0.0
    %934 = vmatprep.subr.mxu0 0.0
    %935 = vmatpush1.xpose.msra.mxu0 0.0
    %936 = vmatprep.mubr.f32.mxu0 0.0
    %937 = vmatmul.mubr.f32.gmra.mrb[0].mxu0 %v864
    %v938 = vpop.f32.mrb[0].mxu0
    %v939 = vadd.f32 0.0, %v938
    %v940 = vpop.f32.mrb[0].mxu0
    %941 = vmatprep.mubr.f32.mxu0 0.0
    %942 = vmatmul.mubr.f32.gmra.mrb[0].mxu0 %v866
    %v943 = vpop.f32.mrb[0].mxu0
    %v944 = vadd.f32 0.0, %v943
    %v945 = vpop.f32.mrb[0].mxu0
    %946 = vdwg.mxu0
    %v947 = vsel %vm348, %v939, -inf
    %948 = vmax.xlane.f32.xlu0 %v947
    %v949 = vpop.xlane.xlu0 %948
    %v950 = vsel %vm348, %v944, -inf
    %951 = vmax.xlane.f32.xlu0 %v950
    %v952 = vpop.xlane.xlu0 %951
    %v953 = vsub.f32 %v939, %v949
    %v954 = vsub.f32 %v944, %v952
    %v955 = vmul.f32 %v953, 1.442695
    %v956 = vpow.pop %v955
    %v957 = vmul.f32 %v954, 1.442695
    %v958 = vpow.pop %v957
    %v959 = vsel %vm348, %v956, 0.0
    %960 = vadd.xlane.f32.xlu0 %v959
    %v961 = vpop.xlane.xlu0 %960
    %v962 = vsel %vm348, %v958, 0.0
    %963 = vadd.xlane.f32.xlu0 %v962
    %v964 = vpop.xlane.xlu0 %963
    %v965 = vrcp.pop %v961
    %v966 = vrcp.pop %v964
    %v967 = vmul.f32 %v956, %v965
    %v968 = vmul.f32 %v958, %v966
    %971 = vrot.lane.b32.xlu0 %v251, 96
    %v972 = vpop.permute.xlu0 %971
    %973 = vrot.lane.b32.xlu0 %v257, 96
    %v974 = vpop.permute.xlu0 %973
    %v978 = vsel %vm348, %v967, 0
    %v981 = vsel %vm348, %v968, 0
    %983 = vmatprep.subr.mxu0 0.0
    %984 = vmatpush1.msra.mxu0 %v972
    %985 = vmatprep.subr.mxu0 0.0
    %986 = vmatpush1.msra.mxu0 %v974
    %987 = vmatprep.subr.mxu0 0.0
    %988 = vmatpush1.msra.mxu0 0.0
    %989 = vmatprep.subr.mxu0 0.0
    %990 = vmatpush1.msra.mxu0 0.0
    %991 = vmatprep.subr.mxu0 0.0
    %992 = vmatpush1.msra.mxu0 0.0
    %993 = vmatprep.subr.mxu0 0.0
    %994 = vmatpush1.msra.mxu0 0.0
    %995 = vmatprep.subr.mxu0 0.0
    %996 = vmatpush1.msra.mxu0 0.0
    %997 = vmatprep.subr.mxu0 0.0
    %998 = vmatpush1.msra.mxu0 0.0
    %999 = vmatprep.subr.mxu0 0.0
    %1000 = vmatpush1.msra.mxu0 0.0
    %1001 = vmatprep.subr.mxu0 0.0
    %1002 = vmatpush1.msra.mxu0 0.0
    %1003 = vmatprep.subr.mxu0 0.0
    %1004 = vmatpush1.msra.mxu0 0.0
    %1005 = vmatprep.subr.mxu0 0.0
    %1006 = vmatpush1.msra.mxu0 0.0
    %1007 = vmatprep.subr.mxu0 0.0
    %1008 = vmatpush1.msra.mxu0 0.0
    %1009 = vmatprep.subr.mxu0 0.0
    %1010 = vmatpush1.msra.mxu0 0.0
    %1011 = vmatprep.subr.mxu0 0.0
    %1012 = vmatpush1.msra.mxu0 0.0
    %1013 = vmatprep.subr.mxu0 0.0
    %1014 = vmatpush1.msra.mxu0 0.0
    %1015 = vmatprep.subr.mxu0 0.0
    %1016 = vmatpush1.msra.mxu0 0.0
    %1017 = vmatprep.subr.mxu0 0.0
    %1018 = vmatpush1.msra.mxu0 0.0
    %1019 = vmatprep.subr.mxu0 0.0
    %1020 = vmatpush1.msra.mxu0 0.0
    %1021 = vmatprep.subr.mxu0 0.0
    %1022 = vmatpush1.msra.mxu0 0.0
    %1023 = vmatprep.subr.mxu0 0.0
    %1024 = vmatpush1.msra.mxu0 0.0
    %1025 = vmatprep.subr.mxu0 0.0
    %1026 = vmatpush1.msra.mxu0 0.0
    %1027 = vmatprep.subr.mxu0 0.0
    %1028 = vmatpush1.msra.mxu0 0.0
    %1029 = vmatprep.subr.mxu0 0.0
    %1030 = vmatpush1.msra.mxu0 0.0
    %1031 = vmatprep.subr.mxu0 0.0
    %1032 = vmatpush1.msra.mxu0 0.0
    %1033 = vmatprep.subr.mxu0 0.0
    %1034 = vmatpush1.msra.mxu0 0.0
    %1035 = vmatprep.subr.mxu0 0.0
    %1036 = vmatpush1.msra.mxu0 0.0
    %1037 = vmatprep.subr.mxu0 0.0
    %1038 = vmatpush1.msra.mxu0 0.0
    %1039 = vmatprep.subr.mxu0 0.0
    %1040 = vmatpush1.msra.mxu0 0.0
    %1041 = vmatprep.subr.mxu0 0.0
    %1042 = vmatpush1.msra.mxu0 0.0
    %1043 = vmatprep.subr.mxu0 0.0
    %1044 = vmatpush1.msra.mxu0 0.0
    %1045 = vmatprep.subr.mxu0 0.0
    %1046 = vmatpush1.msra.mxu0 0.0
    %1047 = vmatprep.mubr.f32.mxu0 0.0
    %1048 = vmatmul.mubr.f32.gmra.mrb[0].mxu0 %v978
    %v1049 = vpop.f32.mrb[0].mxu0
    %v1050 = vadd.f32 0.0, %v1049
    %v1051 = vpop.f32.mrb[0].mxu0
    %1052 = vmatprep.mubr.f32.mxu0 0.0
    %1053 = vmatmul.mubr.f32.gmra.mrb[0].mxu0 %v981
    %v1054 = vpop.f32.mrb[0].mxu0
    %v1055 = vadd.f32 0.0, %v1054
    %v1056 = vpop.f32.mrb[0].mxu0
    %1057 = vdwg.mxu0
    %1060 = vrot.lane.b32.xlu0 %v1050, 32
    %v1061 = vpop.permute.xlu0 %1060
    %1062 = vrot.lane.b32.xlu0 %v1055, 32
    %v1063 = vpop.permute.xlu0 %1062
    %v1066 = vsel %vm157, %v848, %v1061
    %v1067 = vsel %vm157, %v853, %v1063
    %v1068 = vld [vmem:[#allocation7] sm:$0xff]
    %v1069 = vld [vmem:[#allocation7 + $0x8] sm:$0xff]
    %v1070 = vld [vmem:[#allocation7 + $0x10] sm:$0xff]
    %v1071 = vld [vmem:[#allocation7 + $0x18] sm:$0xff]
    %v1072 = vld [vmem:[#allocation7 + $0x20] sm:$0xff]
    %v1073 = vld [vmem:[#allocation7 + $0x28] sm:$0xff]
    %v1074 = vld [vmem:[#allocation7 + $0x30] sm:$0xff]
    %v1075 = vld [vmem:[#allocation7 + $0x38] sm:$0xff]
    %v1076 = vld [vmem:[#allocation8] sm:$0x1]
    %v1078 = vlaneseq
    %v1079 = vshrl.u32 %v1078, 7
    %v1080 = vsub.s32 0, %v1079
    %v1081 = vrot.slane %v1076, %v1080
    %vm1083 = vcmask 523264
    %v1085 = vsel %vm1083, %v662, 0
    %v1088 = vsel %vm1083, %v663, 0
    %v1091 = vsel %vm1083, %v1066, 0
    %v1094 = vsel %vm1083, %v1067, 0
    %1096 = vmatprep.subr.mxu0 0.0
    %1097 = vmatpush1.msra.mxu0 %v1068
    %1098 = vmatprep.subr.mxu0 0.0
    %1099 = vmatpush1.msra.mxu0 %v1069
    %1100 = vmatprep.subr.mxu0 0.0
    %1101 = vmatpush1.msra.mxu0 %v1070
    %1102 = vmatprep.subr.mxu0 0.0
    %1103 = vmatpush1.msra.mxu0 %v1071
    %1104 = vmatprep.subr.mxu0 0.0
    %1105 = vmatpush1.msra.mxu0 %v1072
    %1106 = vmatprep.subr.mxu0 0.0
    %1107 = vmatpush1.msra.mxu0 %v1073
    %1108 = vmatprep.subr.mxu0 0.0
    %1109 = vmatpush1.msra.mxu0 %v1074
    %1110 = vmatprep.subr.mxu0 0.0
    %1111 = vmatpush1.msra.mxu0 %v1075
    %1112 = vmatprep.subr.mxu0 0.0
    %1113 = vmatpush1.msra.mxu0 0.0
    %1114 = vmatprep.subr.mxu0 0.0
    %1115 = vmatpush1.msra.mxu0 0.0
    %1116 = vmatprep.subr.mxu0 0.0
    %1117 = vmatpush1.msra.mxu0 0.0
    %1118 = vmatprep.subr.mxu0 0.0
    %1119 = vmatpush1.msra.mxu0 0.0
    %1120 = vmatprep.subr.mxu0 0.0
    %1121 = vmatpush1.msra.mxu0 0.0
    %1122 = vmatprep.subr.mxu0 0.0
    %1123 = vmatpush1.msra.mxu0 0.0
    %1124 = vmatprep.subr.mxu0 0.0
    %1125 = vmatpush1.msra.mxu0 0.0
    %1126 = vmatprep.subr.mxu0 0.0
    %1127 = vmatpush1.msra.mxu0 0.0
    %1128 = vmatprep.subr.mxu0 0.0
    %1129 = vmatpush1.msra.mxu0 0.0
    %1130 = vmatprep.subr.mxu0 0.0
    %1131 = vmatpush1.msra.mxu0 0.0
    %1132 = vmatprep.subr.mxu0 0.0
    %1133 = vmatpush1.msra.mxu0 0.0
    %1134 = vmatprep.subr.mxu0 0.0
    %1135 = vmatpush1.msra.mxu0 0.0
    %1136 = vmatprep.subr.mxu0 0.0
    %1137 = vmatpush1.msra.mxu0 0.0
    %1138 = vmatprep.subr.mxu0 0.0
    %1139 = vmatpush1.msra.mxu0 0.0
    %1140 = vmatprep.subr.mxu0 0.0
    %1141 = vmatpush1.msra.mxu0 0.0
    %1142 = vmatprep.subr.mxu0 0.0
    %1143 = vmatpush1.msra.mxu0 0.0
    %1144 = vmatprep.subr.mxu0 0.0
    %1145 = vmatpush1.msra.mxu0 0.0
    %1146 = vmatprep.subr.mxu0 0.0
    %1147 = vmatpush1.msra.mxu0 0.0
    %1148 = vmatprep.subr.mxu0 0.0
    %1149 = vmatpush1.msra.mxu0 0.0
    %1150 = vmatprep.subr.mxu0 0.0
    %1151 = vmatpush1.msra.mxu0 0.0
    %1152 = vmatprep.subr.mxu0 0.0
    %1153 = vmatpush1.msra.mxu0 0.0
    %1154 = vmatprep.subr.mxu0 0.0
    %1155 = vmatpush1.msra.mxu0 0.0
    %1156 = vmatprep.subr.mxu0 0.0
    %1157 = vmatpush1.msra.mxu0 0.0
    %1158 = vmatprep.subr.mxu0 0.0
    %1159 = vmatpush1.msra.mxu0 0.0
    %1160 = vmatprep.mubr.f32.mxu0 0.0
    %1161 = vmatmul.mubr.f32.gmra.mrb[0].mxu0 %v1085
    %v1162 = vpop.f32.mrb[0].mxu0
    %v1163 = vadd.f32 %v1081, %v1162
    %v1164 = vpop.f32.mrb[0].mxu0
    %1165 = vmatprep.mubr.f32.mxu0 0.0
    %1166 = vmatmul.mubr.f32.gmra.mrb[0].mxu0 %v1088
    %v1167 = vpop.f32.mrb[0].mxu0
    %v1168 = vadd.f32 %v1081, %v1167
    %v1169 = vpop.f32.mrb[0].mxu0
    %1170 = vmatprep.mubr.f32.mxu0 0.0
    %1171 = vmatmul.mubr.f32.gmra.mrb[0].mxu0 %v1091
    %v1172 = vpop.f32.mrb[0].mxu0
    %v1173 = vadd.f32 %v1081, %v1172
    %v1174 = vpop.f32.mrb[0].mxu0
    %1175 = vmatprep.mubr.f32.mxu0 0.0
    %1176 = vmatmul.mubr.f32.gmra.mrb[0].mxu0 %v1094
    %v1177 = vpop.f32.mrb[0].mxu0
    %v1178 = vadd.f32 %v1081, %v1177
    %v1179 = vpop.f32.mrb[0].mxu0
    %1180 = vdwg.mxu0
    %v1181 = vsel %vm157, %v1163, 0.0
    %v1182 = vsel %vm157, %v1168, 0.0
    %v1183 = vadd.f32 %v1181, %v1182
    %v1184 = vsel %vm157, %v1173, 0.0
    %v1185 = vadd.f32 %v1183, %v1184
    %v1186 = vsel %vm157, %v1178, 0.0
    %v1187 = vadd.f32 %v1185, %v1186
    %v1188 = vrot.slane %v1187, 4
    %v1189 = vadd.f32 %v1187, %v1188
    %v1190 = vrot.slane %v1189, 2
    %v1191 = vadd.f32 %v1189, %v1190
    %v1192 = vrot.slane %v1191, 1
    %v1193 = vadd.f32 %v1191, %v1192
    %v1194 = vmul.f32 %v1193, 0.03125
    %v1195 = vsub.f32 %v1163, %v1194
    %v1196 = vsub.f32 %v1168, %v1194
    %v1197 = vsub.f32 %v1173, %v1194
    %v1198 = vsub.f32 %v1178, %v1194
    %v1199 = vmul.f32 %v1195, %v1195
    %v1200 = vmul.f32 %v1196, %v1196
    %v1201 = vmul.f32 %v1197, %v1197
    %v1202 = vmul.f32 %v1198, %v1198
    %v1203 = vsel %vm157, %v1199, 0.0
    %v1204 = vsel %vm157, %v1200, 0.0
    %v1205 = vadd.f32 %v1203, %v1204
    %v1206 = vsel %vm157, %v1201, 0.0
    %v1207 = vadd.f32 %v1205, %v1206
    %v1208 = vsel %vm157, %v1202, 0.0
    %v1209 = vadd.f32 %v1207, %v1208
    %v1210 = vrot.slane %v1209, 4
    %v1211 = vadd.f32 %v1209, %v1210
    %v1212 = vrot.slane %v1211, 2
    %v1213 = vadd.f32 %v1211, %v1212
    %v1214 = vrot.slane %v1213, 1
    %v1215 = vadd.f32 %v1213, %v1214
    %v1216 = vmul.f32 %v1215, 0.03125
    %v1217 = vadd.f32 %v1216, 1e-05
    %v1218 = vrsqrt.pop %v1217
    %v1219 = vmul.f32 %v1195, %v1218
    %v1220 = vmul.f32 %v1196, %v1218
    %v1221 = vmul.f32 %v1197, %v1218
    %v1222 = vmul.f32 %v1198, %v1218
    %v1223 = vld [vmem:[#allocation10] sm:$0x1]
    %v1225 = vlaneseq
    %v1226 = vshrl.u32 %v1225, 7
    %v1227 = vsub.s32 0, %v1226
    %v1228 = vrot.slane %v1223, %v1227
    %v1230 = vmul.f32 %v1219, %v1228
    %v1231 = vmul.f32 %v1220, %v1228
    %v1232 = vmul.f32 %v1221, %v1228
    %v1233 = vmul.f32 %v1222, %v1228
    %v1234 = vld [vmem:[#allocation11] sm:$0x1]
    %v1236 = vlaneseq
    %v1237 = vshrl.u32 %v1236, 7
    %v1238 = vsub.s32 0, %v1237
    %v1239 = vrot.slane %v1234, %v1238
    %v1241 = vadd.f32 %v1230, %v1239
    %v1242 = vadd.f32 %v1231, %v1239
    %v1243 = vadd.f32 %v1232, %v1239
    %v1244 = vadd.f32 %v1233, %v1239
    %v1245 = vadd.f32 %v1241, %v145
    %v1246 = vadd.f32 %v1242, %v146
    %v1247 = vadd.f32 %v1243, %v147
    %v1248 = vadd.f32 %v1244, %v148
    %v1249 = vmax.f32 %v1245, 0.0
    %v1250 = vmax.f32 %v1246, 0.0
    %v1251 = vmax.f32 %v1247, 0.0
    %v1252 = vmax.f32 %v1248, 0.0
    %v1253 = vld [vmem:[#allocation13] sm:$0xff]
    %v1254 = vld [vmem:[#allocation13 + $0x8] sm:$0xff]
    %v1255 = vld [vmem:[#allocation13 + $0x10] sm:$0xff]
    %v1256 = vld [vmem:[#allocation13 + $0x18] sm:$0xff]
    %v1258 = vsel %vm157, %v1249, 0
    %v1261 = vsel %vm157, %v1250, 0
    %v1264 = vsel %vm157, %v1251, 0
    %v1267 = vsel %vm157, %v1252, 0
    %1269 = vmatprep.subr.mxu0 0.0
    %1270 = vmatpush1.msra.mxu0 %v1253
    %1271 = vmatprep.subr.mxu0 0.0
    %1272 = vmatpush1.msra.mxu0 %v1254
    %1273 = vmatprep.subr.mxu0 0.0
    %1274 = vmatpush1.msra.mxu0 %v1255
    %1275 = vmatprep.subr.mxu0 0.0
    %1276 = vmatpush1.msra.mxu0 %v1256
    %1277 = vmatprep.subr.mxu0 0.0
    %1278 = vmatpush1.msra.mxu0 0.0
    %1279 = vmatprep.subr.mxu0 0.0
    %1280 = vmatpush1.msra.mxu0 0.0
    %1281 = vmatprep.subr.mxu0 0.0
    %1282 = vmatpush1.msra.mxu0 0.0
    %1283 = vmatprep.subr.mxu0 0.0
    %1284 = vmatpush1.msra.mxu0 0.0
    %1285 = vmatprep.subr.mxu0 0.0
    %1286 = vmatpush1.msra.mxu0 0.0
    %1287 = vmatprep.subr.mxu0 0.0
    %1288 = vmatpush1.msra.mxu0 0.0
    %1289 = vmatprep.subr.mxu0 0.0
    %1290 = vmatpush1.msra.mxu0 0.0
    %1291 = vmatprep.subr.mxu0 0.0
    %1292 = vmatpush1.msra.mxu0 0.0
    %1293 = vmatprep.subr.mxu0 0.0
    %1294 = vmatpush1.msra.mxu0 0.0
    %1295 = vmatprep.subr.mxu0 0.0
    %1296 = vmatpush1.msra.mxu0 0.0
    %1297 = vmatprep.subr.mxu0 0.0
    %1298 = vmatpush1.msra.mxu0 0.0
    %1299 = vmatprep.subr.mxu0 0.0
    %1300 = vmatpush1.msra.mxu0 0.0
    %1301 = vmatprep.subr.mxu0 0.0
    %1302 = vmatpush1.msra.mxu0 0.0
    %1303 = vmatprep.subr.mxu0 0.0
    %1304 = vmatpush1.msra.mxu0 0.0
    %1305 = vmatprep.subr.mxu0 0.0
    %1306 = vmatpush1.msra.mxu0 0.0
    %1307 = vmatprep.subr.mxu0 0.0
    %1308 = vmatpush1.msra.mxu0 0.0
    %1309 = vmatprep.subr.mxu0 0.0
    %1310 = vmatpush1.msra.mxu0 0.0
    %1311 = vmatprep.subr.mxu0 0.0
    %1312 = vmatpush1.msra.mxu0 0.0
    %1313 = vmatprep.subr.mxu0 0.0
    %1314 = vmatpush1.msra.mxu0 0.0
    %1315 = vmatprep.subr.mxu0 0.0
    %1316 = vmatpush1.msra.mxu0 0.0
    %1317 = vmatprep.subr.mxu0 0.0
    %1318 = vmatpush1.msra.mxu0 0.0
    %1319 = vmatprep.subr.mxu0 0.0
    %1320 = vmatpush1.msra.mxu0 0.0
    %1321 = vmatprep.subr.mxu0 0.0
    %1322 = vmatpush1.msra.mxu0 0.0
    %1323 = vmatprep.subr.mxu0 0.0
    %1324 = vmatpush1.msra.mxu0 0.0
    %1325 = vmatprep.subr.mxu0 0.0
    %1326 = vmatpush1.msra.mxu0 0.0
    %1327 = vmatprep.subr.mxu0 0.0
    %1328 = vmatpush1.msra.mxu0 0.0
    %1329 = vmatprep.subr.mxu0 0.0
    %1330 = vmatpush1.msra.mxu0 0.0
    %1331 = vmatprep.subr.mxu0 0.0
    %1332 = vmatpush1.msra.mxu0 0.0
    %1333 = vmatprep.mubr.f32.mxu0 0.0
    %1334 = vmatmul.mubr.f32.gmra.mrb[0].mxu0 %v1258
    %v1335 = vpop.f32.mrb[0].mxu0
    %v1336 = vadd.f32 0.0, %v1335
    %v1337 = vpop.f32.mrb[0].mxu0
    %1338 = vmatprep.mubr.f32.mxu0 0.0
    %1339 = vmatmul.mubr.f32.gmra.mrb[0].mxu0 %v1261
    %v1340 = vpop.f32.mrb[0].mxu0
    %v1341 = vadd.f32 0.0, %v1340
    %v1342 = vpop.f32.mrb[0].mxu0
    %1343 = vmatprep.mubr.f32.mxu0 0.0
    %1344 = vmatmul.mubr.f32.gmra.mrb[0].mxu0 %v1264
    %v1345 = vpop.f32.mrb[0].mxu0
    %v1346 = vadd.f32 0.0, %v1345
    %v1347 = vpop.f32.mrb[0].mxu0
    %1348 = vmatprep.mubr.f32.mxu0 0.0
    %1349 = vmatmul.mubr.f32.gmra.mrb[0].mxu0 %v1267
    %v1350 = vpop.f32.mrb[0].mxu0
    %v1351 = vadd.f32 0.0, %v1350
    %v1352 = vpop.f32.mrb[0].mxu0
    %1353 = vdwg.mxu0
    %v1354 = vsel %vm157, %v1336, 0.0
    %v1355 = vsel %vm157, %v1341, 0.0
    %v1356 = vadd.f32 %v1354, %v1355
    %v1357 = vsel %vm157, %v1346, 0.0
    %v1358 = vadd.f32 %v1356, %v1357
    %v1359 = vsel %vm157, %v1351, 0.0
    %v1360 = vadd.f32 %v1358, %v1359
    %v1361 = vrot.slane %v1360, 4
    %v1362 = vadd.f32 %v1360, %v1361
    %v1363 = vrot.slane %v1362, 2
    %v1364 = vadd.f32 %v1362, %v1363
    %v1365 = vrot.slane %v1364, 1
    %v1366 = vadd.f32 %v1364, %v1365
    %v1367 = vmul.f32 %v1366, 0.03125
    %v1368 = vsub.f32 %v1336, %v1367
    %v1369 = vsub.f32 %v1341, %v1367
    %v1370 = vsub.f32 %v1346, %v1367
    %v1371 = vsub.f32 %v1351, %v1367
    %v1372 = vmul.f32 %v1368, %v1368
    %v1373 = vmul.f32 %v1369, %v1369
    %v1374 = vmul.f32 %v1370, %v1370
    %v1375 = vmul.f32 %v1371, %v1371
    %v1376 = vsel %vm157, %v1372, 0.0
    %v1377 = vsel %vm157, %v1373, 0.0
    %v1378 = vadd.f32 %v1376, %v1377
    %v1379 = vsel %vm157, %v1374, 0.0
    %v1380 = vadd.f32 %v1378, %v1379
    %v1381 = vsel %vm157, %v1375, 0.0
    %v1382 = vadd.f32 %v1380, %v1381
    %v1383 = vrot.slane %v1382, 4
    %v1384 = vadd.f32 %v1382, %v1383
    %v1385 = vrot.slane %v1384, 2
    %v1386 = vadd.f32 %v1384, %v1385
    %v1387 = vrot.slane %v1386, 1
    %v1388 = vadd.f32 %v1386, %v1387
    %v1389 = vmul.f32 %v1388, 0.03125
    %v1390 = vadd.f32 %v1389, 1e-05
    %v1391 = vrsqrt.pop %v1390
    %v1392 = vmul.f32 %v1368, %v1391
    %v1393 = vmul.f32 %v1369, %v1391
    %v1394 = vmul.f32 %v1370, %v1391
    %v1395 = vmul.f32 %v1371, %v1391
    %v1396 = vld [vmem:[#allocation14] sm:$0x1]
    %v1398 = vlaneseq
    %v1399 = vshrl.u32 %v1398, 7
    %v1400 = vsub.s32 0, %v1399
    %v1401 = vrot.slane %v1396, %v1400
    %v1403 = vmul.f32 %v1392, %v1401
    %v1404 = vmul.f32 %v1393, %v1401
    %v1405 = vmul.f32 %v1394, %v1401
    %v1406 = vmul.f32 %v1395, %v1401
    %v1407 = vld [vmem:[#allocation16] sm:$0x1]
    %v1409 = vlaneseq
    %v1410 = vshrl.u32 %v1409, 7
    %v1411 = vsub.s32 0, %v1410
    %v1412 = vrot.slane %v1407, %v1411
    %v1414 = vadd.f32 %v1403, %v1412
    %v1415 = vadd.f32 %v1404, %v1412
    %v1416 = vadd.f32 %v1405, %v1412
    %v1417 = vadd.f32 %v1406, %v1412
    %v1418 = vadd.f32 %v1249, %v1414
    %v1419 = vadd.f32 %v1250, %v1415
    %v1420 = vadd.f32 %v1251, %v1416
    %v1421 = vadd.f32 %v1252, %v1417
    %v1422 = vmax.f32 %v1418, 0.0
    %v1423 = vmax.f32 %v1419, 0.0
    %v1424 = vmax.f32 %v1420, 0.0
    %v1425 = vmax.f32 %v1421, 0.0
    %1426 = vst.msk [vmem:[#allocation17] sm:$0xff] %vm157, %v1422
    %1427 = vst.msk [vmem:[#allocation17 + $0x8] sm:$0xff] %vm157, %v1423
    %1428 = vst.msk [vmem:[#allocation17 + $0x10] sm:$0xff] %vm157, %v1424
    %1429 = vst.msk [vmem:[#allocation17 + $0x18] sm:$0xff] %vm157, %v1425
    // Predicated region
    $region74: #{transformer_block_forward.1} parent=1 // pred_check
      _
    $region75: #{transformer_block_forward.1} parent=1 // pred_check_branch
      %1431 = sbr.rel (0) target = $region77
    $region76: #{transformer_block_forward.1} parent=1 // pred_region
      %s1433 = ssub.s32 512, 512
      %1434 = vsyncadd [#allocation4], %s1433
      %s1435 = sshll.u32 [#allocation17], 4
      %s1436 = int_to_ptr.vmem [resolvable:$true] %s1435
      %1441 = dma.vmem_to_hbm [thread:$0]  %s1436, 512, %s9, [#allocation4], 128, 128, 8
    $region77: #{transformer_block_forward.1} parent=1 // pred_fallthru
      _
    // Predicated region
    $region78: #{transformer_block_forward.1} parent=1 // pred_check
      _
    $region79: #{transformer_block_forward.1} parent=1 // pred_check_branch
      %1443 = sbr.rel (0) target = $region81
    $region80: #{transformer_block_forward.1} parent=1 // pred_region
      %1444 = dma.done [#allocation4], 512
    $region81: #{transformer_block_forward.1} parent=1 // pred_fallthru
      _
    %1445 = vsyncpa [#allocation3], 1
    %1446 = vsyncpa [#allocation6], 1
    %1447 = vsyncpa [#allocation9], 1
    %1448 = vsyncpa [#allocation12], 1
    %1449 = vsyncpa [#allocation15], 1
    %1450 = vsyncpa [#allocation4], 1

</llo_original>
